<compile_context>
chip_gen: v7x
topology: tpu7x:2x2x1
jax: 0.10.0
libtpu: 0.0.40
codegen_flags: <defaults>
</compile_context>

<pallas_src>
import math

import jax
import jax.numpy as jnp
from jax.experimental import pallas as pl
from jax.experimental.pallas import tpu as pltpu


# ----------------------------------------------------------------------------- kernel --
def _graph_attention_kernel(h0_dst_ref, u_ref, e_ref, adj_bias_ref,
                            w_dst_ref, w3_ref, w5_ref,
                            gamma_ref, beta_ref,
                            wa_ref, ba_ref, wb_ref, bb_ref,
                            out_ref,
                            vkh_sc, m_sc, l_sc, acc_sc):
    s = pl.program_id(2)                      # source-tile index (innermost, "arbitrary")
    T, C = h0_dst_ref.shape                   # dst tile, channels
    Ts = adj_bias_ref.shape[1]                # src tile

    # --- once per (batch, dst-tile): fused dst projections + online-softmax state -----
    @pl.when(s == 0)
    def _():
        vkh_sc[...] = jnp.dot(h0_dst_ref[...], w_dst_ref[...],
                              preferred_element_type=jnp.float32)   # [T, 3C] = v | k | h6
        m_sc[...] = jnp.full_like(m_sc, -1e30)
        l_sc[...] = jnp.zeros_like(l_sc)
        acc_sc[...] = jnp.zeros_like(acc_sc)

    # --- edge projections (dominant MXU work): bf16 operands, f32 accumulation --------
    e2d = e_ref[...]                                                  # [T*Ts, C] bf16
    x3 = jnp.dot(e2d, w3_ref[...],
                 preferred_element_type=jnp.float32).reshape(T, Ts, C)
    x5 = jnp.dot(e2d, w5_ref[...],
                 preferred_element_type=jnp.float32).reshape(T, Ts, C)

    # logits[i,j,c] = (u[j,c] / sqrt(d_head)) * (v[i,c] + x3[i,j,c]); scale folded into u.
    vkh = vkh_sc[...]
    v = vkh[:, 0 * C:1 * C]                                           # [T, C]
    logits = u_ref[...][None, :, :] * (v[:, None, :] + x3)            # [T, Ts, C] f32
    # additive adjacency bias (0 on edges, -1e30 off); exp underflow -> exact zeros
    # off-mask once a real (self-loop) edge sets the running row max.
    logits = logits + adj_bias_ref[...].astype(jnp.float32)           # bcast over lanes

    # --- online (flash-style) edge_softmax over incoming edges (source axis) ----------
    m_prev = m_sc[...]                                                # [T, C]
    m_new = jnp.maximum(m_prev, jnp.max(logits, axis=1))              # [T, C]
    alpha = jnp.exp(m_prev - m_new)
    p = jnp.exp(logits - m_new[:, None, :])                           # [T, Ts, C]
    l_sc[...] = alpha * l_sc[...] + jnp.sum(p, axis=1)
    acc_sc[...] = alpha * acc_sc[...] + jnp.sum(p * x5, axis=1)
    m_sc[...] = m_new

    # --- once per (batch, dst-tile): aggregate, LayerNorm -> MLP residual -> LayerNorm --
    @pl.when(s == pl.num_programs(2) - 1)
    def _():
        vkh_f = vkh_sc[...]
        k = vkh_f[:, 1 * C:2 * C]
        h6 = vkh_f[:, 2 * C:3 * C]
        # softmax rows sum to 1 over the mask (self-loop invariant) =>
        #   sum_j attn * (k + x5) == k + (sum_j p * x5) / denom
        h = h6 + k + acc_sc[...] * pl.reciprocal(l_sc[...], approx=True)

        gamma = gamma_ref[...]
        beta = beta_ref[...]

        def layer_norm(x):
            mu = jnp.mean(x, axis=-1, keepdims=True)
            var = jnp.mean((x - mu) ** 2, axis=-1, keepdims=True)
            return (x - mu) * jax.lax.rsqrt(var + 1e-5) * gamma + beta

        h = layer_norm(h)
        hh = jnp.dot(h, wa_ref[...], preferred_element_type=jnp.float32) + ba_ref[...]
        hh = jnp.maximum(hh, 0.0)
        hh = jnp.dot(hh, wb_ref[...], preferred_element_type=jnp.float32) + bb_ref[...]
        h = layer_norm(h + hh)
        # TODO(synk): F.dropout is identity for the default eval forward (training=False).
        out_ref[...] = h


# -------------------------------------------------------------------- tiling / budget --
def _step_vmem_bytes(t, ts, c):
    """Rough per-grid-step VMEM working set (bytes), incl. pipeline double buffering."""
    e_tile = 2 * (2 * t * ts * c)          # bf16 e block, 2 buffers
    mask = 2 * (2 * t * ts * 128)          # bf16 [t,ts,1] bias, lane-padded to 128
    temps = 4 * (4 * t * ts * c)           # x3, x5, logits, p live in f32
    small = 4 * (2 * (t + ts) * c + 8 * t * c + 14 * c * c)
    return e_tile + mask + temps + small


def _pick_tiles(N, C, budget_bytes):
    # Source tile: full N for small graphs; otherwise a 128-multiple divisor of N
    # (lane constraint of the mask block, and keeps in-kernel reshapes relabel-only).
    ts = N
    if N % 128 == 0:
        while ts > 128 and N % ts == 0 and _step_vmem_bytes(8, ts, C) > budget_bytes:
            ts //= 2
        if ts % 128 or N % ts:
            ts = 128
    # Dst tile: largest divisor of N (multiple of 8, or N itself) that fits the budget.
    cands = sorted({d for d in range(8, N + 1, 8) if N % d == 0} | {N})
    t = cands[0]
    for d in cands:
        if _step_vmem_bytes(d, ts, C) <= budget_bytes:
            t = d
    return t, ts


# ---------------------------------------------------------------------------- wrapper --
def graph_attention(h0, e_feat, adj, params, num_heads,
                    tile_dst=None, tile_src=None, vmem_budget_bytes=None):
    """h0: [B,N,C]; e_feat: [B,N,N,C] (dst,src,C); adj: [B,N,N] (dst,src) -> [B,N,C]."""
    B, N, C = h0.shape
    assert e_feat.shape == (B, N, N, C)
    assert adj.shape == (B, N, N)
    assert C % num_heads == 0

    if vmem_budget_bytes is None:
        # Conservative default: ~2x headroom under v7x's 64 MiB physical VMEM
        # (v5e/v6e have 128 MiB and can be given a larger budget).
        vmem_budget_bytes = 24 << 20
    T_auto, Ts_auto = _pick_tiles(N, C, vmem_budget_bytes)
    T = T_auto if tile_dst is None else tile_dst
    Ts = Ts_auto if tile_src is None else tile_src
    assert N % T == 0 and (T == N or T % 8 == 0), "dst tile must divide N (sublane mult)"
    assert N % Ts == 0 and (Ts == N or Ts % 128 == 0), "src tile must divide N (lane mult)"
    n_s = N // Ts

    # --- host-side prep (plain XLA, outside the kernel) -------------------------------
    scale = 1.0 / math.sqrt(C // num_heads)
    # u depends only on the source node; hoist it and fold the 1/sqrt(d_head) scale in.
    u_scaled = (h0.astype(jnp.float32) @ params["w1"].astype(jnp.float32)) * scale
    w_dst = jnp.concatenate([params["w2"], params["w4"], params["w6"]], axis=1)  # [C,3C]
    # bf16 operands for the dominant edge projection (f32 accumulation in-kernel).
    if n_s == 1:
        e_r = e_feat.reshape(B, 1, N * N, C)
    else:  # src-tile-major layout so each (dst,src) block is a contiguous 2-D slab
        e_r = (e_feat.reshape(B, N, n_s, Ts, C)
               .transpose(0, 2, 1, 3, 4)
               .reshape(B, n_s, N * Ts, C))
    e_r = e_r.astype(jnp.bfloat16)
    w3_bf = params["w3"].astype(jnp.bfloat16)
    w5_bf = params["w5"].astype(jnp.bfloat16)
    # Additive mask bias, channel-free in HBM (bf16: {0, -1e30} are exactly representable).
    adj_bias = (((adj.astype(jnp.float32) - 1.0) * 1e30)[..., None]).astype(jnp.bfloat16)

    grid = (B, N // T, n_s)

    in_specs = [
        pl.BlockSpec((None, T, C), lambda b, d, s: (b, d, 0)),            # h0 dst tile
        pl.BlockSpec((None, Ts, C), lambda b, d, s: (b, s, 0)),           # u*scale src tile
        pl.BlockSpec((None, None, T * Ts, C), lambda b, d, s: (b, s, d, 0)),  # e (bf16)
        pl.BlockSpec((None, T, Ts, 1), lambda b, d, s: (b, d, s, 0)),     # mask bias (bf16)
        pl.BlockSpec((C, 3 * C), lambda b, d, s: (0, 0)),                 # w2|w4|w6
        pl.BlockSpec((C, C), lambda b, d, s: (0, 0)),                     # w3 (bf16)
        pl.BlockSpec((C, C), lambda b, d, s: (0, 0)),                     # w5 (bf16)
        pl.BlockSpec((1, C), lambda b, d, s: (0, 0)),                     # ln gamma
        pl.BlockSpec((1, C), lambda b, d, s: (0, 0)),                     # ln beta
        pl.BlockSpec((C, 2 * C), lambda b, d, s: (0, 0)),                 # mlp w1
        pl.BlockSpec((1, 2 * C), lambda b, d, s: (0, 0)),                 # mlp b1
        pl.BlockSpec((2 * C, C), lambda b, d, s: (0, 0)),                 # mlp w2
        pl.BlockSpec((1, C), lambda b, d, s: (0, 0)),                     # mlp b2
    ]
    out_specs = pl.BlockSpec((None, T, C), lambda b, d, s: (b, d, 0))
    scratch_shapes = [
        pltpu.VMEM((T, 3 * C), jnp.float32),   # v | k | h6 (computed once per dst tile)
        pltpu.VMEM((T, C), jnp.float32),       # running max
        pltpu.VMEM((T, C), jnp.float32),       # running denom
        pltpu.VMEM((T, C), jnp.float32),       # running sum of p * x5
    ]

    # Advisory cost hint (actual DMA: bf16 e + 1-channel mask + per-step h0/u re-fetches).
    flops = B * (4 * N * N * C * C + 6 * N * C * C + 8 * N * C * C + 12 * N * N * C)
    transcendentals = B * (N * N * C + 2 * N * C * n_s)
    bytes_accessed = int(2 * B * N * N * C + 2 * B * N * N
                         + 4 * B * N * C * n_s + 4 * B * N * C * (N // T)
                         + 4 * B * N * C
                         + 4 * (3 * C * C + 4 * C * C + 7 * C) + 2 * 2 * C * C)

    est = _step_vmem_bytes(T, Ts, C)
    vmem_limit = int(min(56 << 20, max(32 << 20, 2 * est)))

    return pl.pallas_call(
        _graph_attention_kernel,
        out_shape=jax.ShapeDtypeStruct((B, N, C), jnp.float32),
        grid=grid,
        in_specs=in_specs,
        out_specs=out_specs,
        scratch_shapes=scratch_shapes,
        compiler_params=pltpu.CompilerParams(
            dimension_semantics=("parallel", "parallel", "arbitrary"),
            vmem_limit_bytes=vmem_limit),
        cost_estimate=pl.CostEstimate(flops=int(flops),
                                      transcendentals=int(transcendentals),
                                      bytes_accessed=bytes_accessed),
    )(h0.astype(jnp.float32), u_scaled, e_r, adj_bias,
      w_dst.astype(jnp.float32), w3_bf, w5_bf,
      params["ln_gamma"], params["ln_beta"],
      params["mlp_w1"], params["mlp_b1"], params["mlp_w2"], params["mlp_b2"])


# -------------------------------------------------------------------------- reference --
def graph_attention_reference(h0, e_feat, adj, params, num_heads):
    """Pure-JAX f32 reference for ONE graph, mirroring the original DGL semantics.
    h0: [N,C], e_feat: [N,N,C] (dst,src,C), adj: [N,N] (dst,src)."""
    N, C = h0.shape
    d_head = C // num_heads
    scale = 1.0 / math.sqrt(d_head)
    mask = adj[:, :, None] > 0.5

    u = h0 @ params["w1"]
    v = h0 @ params["w2"]
    k = h0 @ params["w4"]
    h6 = h0 @ params["w6"]
    x3 = jnp.einsum("ijc,cd->ijd", e_feat, params["w3"])
    x5 = jnp.einsum("ijc,cd->ijd", e_feat, params["w5"])

    m = v[:, None, :] + x3
    logits = (u[None, :, :] * m) * scale
    logits = jnp.where(mask, logits, -1e30)
    lmax = jnp.max(logits, axis=1, keepdims=True)
    p = jnp.where(mask, jnp.exp(logits - lmax), 0.0)
    attn = p / jnp.sum(p, axis=1, keepdims=True)

    m2 = k[:, None, :] + x5
    h_agg = jnp.sum(attn * m2 * adj[:, :, None], axis=1)
    h = h6 + h_agg

    def layer_norm(x):
        mu = jnp.mean(x, axis=-1, keepdims=True)
        var = jnp.mean((x - mu) ** 2, axis=-1, keepdims=True)
        return (x - mu) * jax.lax.rsqrt(var + 1e-5) * params["ln_gamma"] + params["ln_beta"]

    h = layer_norm(h)
    hh = jnp.maximum(h @ params["mlp_w1"] + params["mlp_b1"], 0.0)
    hh = hh @ params["mlp_w2"] + params["mlp_b2"]
    return layer_norm(h + hh)


if __name__ == "__main__":
    B = 4            # graphs per batch (grid axis 0)
    N = 8            # nodes per graph
    C = 32           # hidden_dim (real models: keep C a multiple of 128 for lane-dense vregs)
    NUM_HEADS = 4    # num_heads (splitted_dim = 8)

    key = jax.random.PRNGKey(0)
    ks = jax.random.split(key, 16)

    # Adjacency (dst x src): self-loops + bidirectional ring + random extra edges per graph.
    idx = jnp.arange(N)
    ring = jnp.zeros((N, N), jnp.float32)
    ring = ring.at[idx, idx].set(1.0)
    ring = ring.at[idx, (idx + 1) % N].set(1.0)
    ring = ring.at[idx, (idx - 1) % N].set(1.0)
    extra = (jax.random.uniform(ks[0], (B, N, N)) < 0.25).astype(jnp.float32)
    adj = jnp.clip(ring[None, :, :] + extra, 0.0, 1.0)        # self-loops guaranteed

    h0 = jax.random.normal(ks[1], (B, N, C), jnp.float32)
    e_feat = jax.random.normal(ks[2], (B, N, N, C), jnp.float32) * adj[..., None]

    def lin(k, fan_in, shape):
        b = 1.0 / math.sqrt(fan_in)
        return jax.random.uniform(k, shape, jnp.float32, -b, b)

    params = {
        "w1": lin(ks[3], C, (C, C)),
        "w2": lin(ks[4], C, (C, C)),
        "w3": lin(ks[5], C, (C, C)),
        "w4": lin(ks[6], C, (C, C)),
        "w5": lin(ks[7], C, (C, C)),
        "w6": lin(ks[8], C, (C, C)),
        "ln_gamma": jnp.ones((1, C), jnp.float32),
        "ln_beta": jnp.zeros((1, C), jnp.float32),
        "mlp_w1": lin(ks[9], C, (C, 2 * C)),
        "mlp_b1": lin(ks[10], C, (1, 2 * C)),
        "mlp_w2": lin(ks[11], 2 * C, (2 * C, C)),
        "mlp_b2": lin(ks[12], 2 * C, (1, C)),
    }

    out = graph_attention(h0, e_feat, adj, params, NUM_HEADS)
    out = jax.block_until_ready(out)

    ref = jax.vmap(lambda a, b_, c: graph_attention_reference(a, b_, c, params, NUM_HEADS))(
        h0, e_feat, adj)

    assert out.shape == (B, N, C)
    # Kernel uses bf16 MXU operands for the edge projections + approx reciprocal for the
    # softmax denominator; compared against an all-f32 reference, so a bf16-level tolerance.
    assert jnp.allclose(out, ref, atol=3e-2, rtol=3e-2), "mismatch vs reference"

    print("KERNEL_OK")
</pallas_src>

<mosaic_0001>
module attributes {stable_mosaic.version = 11 : i64} {
  func.func @_graph_attention_kernel(%arg0: i32, %arg1: i32, %arg2: i32, %arg3: memref<1x8x32xf32, #tpu.memory_space<vmem>>, %arg4: memref<1x8x32xf32, #tpu.memory_space<vmem>>, %arg5: memref<1x1x64x32xbf16, #tpu.memory_space<vmem>>, %arg6: memref<1x8x8x1xbf16, #tpu.memory_space<vmem>>, %arg7: memref<32x96xf32, #tpu.memory_space<vmem>>, %arg8: memref<32x32xbf16, #tpu.memory_space<vmem>>, %arg9: memref<32x32xbf16, #tpu.memory_space<vmem>>, %arg10: memref<1x32xf32, #tpu.memory_space<vmem>>, %arg11: memref<1x32xf32, #tpu.memory_space<vmem>>, %arg12: memref<32x64xf32, #tpu.memory_space<vmem>>, %arg13: memref<1x64xf32, #tpu.memory_space<vmem>>, %arg14: memref<64x32xf32, #tpu.memory_space<vmem>>, %arg15: memref<1x32xf32, #tpu.memory_space<vmem>>, %arg16: memref<1x8x32xf32, #tpu.memory_space<vmem>>, %arg17: memref<8x96xf32, #tpu.memory_space<vmem>>, %arg18: memref<8x32xf32, #tpu.memory_space<vmem>>, %arg19: memref<8x32xf32, #tpu.memory_space<vmem>>, %arg20: memref<8x32xf32, #tpu.memory_space<vmem>>) attributes {dimension_semantics = [#tpu.dimension_semantics<parallel>, #tpu.dimension_semantics<parallel>, #tpu.dimension_semantics<arbitrary>], iteration_bounds = array<i64: 4, 1, 1>, scalar_prefetch = 0 : i64, scratch_operands = 4 : i64, tpu.core_type = #tpu.core_type<tc>, window_params = [{transform_indices = @transform_0, window_bounds = array<i64: 1, 8, 32>}, {transform_indices = @transform_1, window_bounds = array<i64: 1, 8, 32>}, {transform_indices = @transform_2, window_bounds = array<i64: 1, 1, 64, 32>}, {transform_indices = @transform_3, window_bounds = array<i64: 1, 8, 8, 1>}, {pipeline_mode = #tpu.pipeline_mode<synchronous>, transform_indices = @transform_4, window_bounds = array<i64: 32, 96>}, {pipeline_mode = #tpu.pipeline_mode<synchronous>, transform_indices = @transform_5, window_bounds = array<i64: 32, 32>}, {pipeline_mode = #tpu.pipeline_mode<synchronous>, transform_indices = @transform_6, window_bounds = array<i64: 32, 32>}, {pipeline_mode = #tpu.pipeline_mode<synchronous>, transform_indices = @transform_7, window_bounds = array<i64: 1, 32>}, {pipeline_mode = #tpu.pipeline_mode<synchronous>, transform_indices = @transform_8, window_bounds = array<i64: 1, 32>}, {pipeline_mode = #tpu.pipeline_mode<synchronous>, transform_indices = @transform_9, window_bounds = array<i64: 32, 64>}, {pipeline_mode = #tpu.pipeline_mode<synchronous>, transform_indices = @transform_10, window_bounds = array<i64: 1, 64>}, {pipeline_mode = #tpu.pipeline_mode<synchronous>, transform_indices = @transform_11, window_bounds = array<i64: 64, 32>}, {pipeline_mode = #tpu.pipeline_mode<synchronous>, transform_indices = @transform_12, window_bounds = array<i64: 1, 32>}, {transform_indices = @transform_13, window_bounds = array<i64: 1, 8, 32>}]} {
    %c0_i32 = arith.constant 0 : i32
    %0 = arith.cmpi eq, %arg2, %c0_i32 : i32
    %1 = arith.extui %0 : i1 to i32
    %c0_i32_0 = arith.constant 0 : i32
    %2 = arith.cmpi ne, %1, %c0_i32_0 : i32
    scf.if %2 {
      %c0_35 = arith.constant 0 : index
      %c0_36 = arith.constant 0 : index
      %c0_37 = arith.constant 0 : index
      %50 = vector.load %arg3[%c0_35, %c0_36, %c0_37] : memref<1x8x32xf32, #tpu.memory_space<vmem>>, vector<1x8x32xf32>
      %51 = vector.shape_cast %50 : vector<1x8x32xf32> to vector<8x32xf32>
      %c0_38 = arith.constant 0 : index
      %c0_39 = arith.constant 0 : index
      %52 = vector.load %arg7[%c0_38, %c0_39] : memref<32x96xf32, #tpu.memory_space<vmem>>, vector<32x96xf32>
      %cst_40 = arith.constant dense<0.000000e+00> : vector<8x96xf32>
      %53 = tpu.matmul %51, %52, %cst_40 {dimension_numbers = #tpu.dot_dimension_numbers<[1], [0], [0], [1], [0, 0, 1, 1], [], []>} : vector<8x32xf32>, vector<32x96xf32>, vector<8x96xf32> -> vector<8x96xf32>
      %c0_41 = arith.constant 0 : index
      %c0_42 = arith.constant 0 : index
      %54 = vector.load %arg17[%c0_41, %c0_42] : memref<8x96xf32, #tpu.memory_space<vmem>>, vector<8x96xf32>
      tpu.vector_store %arg17[%c0_41, %c0_42], %53 {strides = array<i32>} : memref<8x96xf32, #tpu.memory_space<vmem>>, vector<8x96xf32>,
      %cst_43 = arith.constant -1.000000e+30 : f32
      %55 = vector.broadcast %cst_43 : f32 to vector<8x32xf32>
      %c0_44 = arith.constant 0 : index
      %c0_45 = arith.constant 0 : index
      %56 = vector.load %arg18[%c0_44, %c0_45] : memref<8x32xf32, #tpu.memory_space<vmem>>, vector<8x32xf32>
      tpu.vector_store %arg18[%c0_44, %c0_45], %55 {strides = array<i32>} : memref<8x32xf32, #tpu.memory_space<vmem>>, vector<8x32xf32>,
      %cst_46 = arith.constant 0.000000e+00 : f32
      %57 = vector.broadcast %cst_46 : f32 to vector<8x32xf32>
      %c0_47 = arith.constant 0 : index
      %c0_48 = arith.constant 0 : index
      %58 = vector.load %arg19[%c0_47, %c0_48] : memref<8x32xf32, #tpu.memory_space<vmem>>, vector<8x32xf32>
      tpu.vector_store %arg19[%c0_47, %c0_48], %57 {strides = array<i32>} : memref<8x32xf32, #tpu.memory_space<vmem>>, vector<8x32xf32>,
      %cst_49 = arith.constant 0.000000e+00 : f32
      %59 = vector.broadcast %cst_49 : f32 to vector<8x32xf32>
      %c0_50 = arith.constant 0 : index
      %c0_51 = arith.constant 0 : index
      %60 = vector.load %arg20[%c0_50, %c0_51] : memref<8x32xf32, #tpu.memory_space<vmem>>, vector<8x32xf32>
      tpu.vector_store %arg20[%c0_50, %c0_51], %59 {strides = array<i32>} : memref<8x32xf32, #tpu.memory_space<vmem>>, vector<8x32xf32>,
    } else {
    }
    %c0 = arith.constant 0 : index
    %c0_1 = arith.constant 0 : index
    %c0_2 = arith.constant 0 : index
    %c0_3 = arith.constant 0 : index
    %3 = vector.load %arg5[%c0, %c0_1, %c0_2, %c0_3] : memref<1x1x64x32xbf16, #tpu.memory_space<vmem>>, vector<1x1x64x32xbf16>
    %4 = vector.shape_cast %3 : vector<1x1x64x32xbf16> to vector<64x32xbf16>
    %c0_4 = arith.constant 0 : index
    %c0_5 = arith.constant 0 : index
    %5 = vector.load %arg8[%c0_4, %c0_5] : memref<32x32xbf16, #tpu.memory_space<vmem>>, vector<32x32xbf16>
    %cst = arith.constant dense<0.000000e+00> : vector<64x32xf32>
    %6 = tpu.matmul %4, %5, %cst {dimension_numbers = #tpu.dot_dimension_numbers<[1], [0], [0], [1], [0, 0, 1, 1], [], []>} : vector<64x32xbf16>, vector<32x32xbf16>, vector<64x32xf32> -> vector<64x32xf32>
    %7 = vector.shape_cast %6 : vector<64x32xf32> to vector<8x8x32xf32>
    %c0_6 = arith.constant 0 : index
    %c0_7 = arith.constant 0 : index
    %8 = vector.load %arg9[%c0_6, %c0_7] : memref<32x32xbf16, #tpu.memory_space<vmem>>, vector<32x32xbf16>
    %cst_8 = arith.constant dense<0.000000e+00> : vector<64x32xf32>
    %9 = tpu.matmul %4, %8, %cst_8 {dimension_numbers = #tpu.dot_dimension_numbers<[1], [0], [0], [1], [0, 0, 1, 1], [], []>} : vector<64x32xbf16>, vector<32x32xbf16>, vector<64x32xf32> -> vector<64x32xf32>
    %10 = vector.shape_cast %9 : vector<64x32xf32> to vector<8x8x32xf32>
    %c0_9 = arith.constant 0 : index
    %c0_10 = arith.constant 0 : index
    %11 = vector.load %arg17[%c0_9, %c0_10] : memref<8x96xf32, #tpu.memory_space<vmem>>, vector<8x96xf32>
    %12 = vector.extract_strided_slice %11 {offsets = [0, 0], sizes = [8, 32], strides = [1, 1]} : vector<8x96xf32> to vector<8x32xf32>
    %c0_11 = arith.constant 0 : index
    %c0_12 = arith.constant 0 : index
    %c0_13 = arith.constant 0 : index
    %13 = vector.load %arg4[%c0_11, %c0_12, %c0_13] : memref<1x8x32xf32, #tpu.memory_space<vmem>>, vector<1x8x32xf32>
    %14 = vector.shape_cast %13 : vector<1x8x32xf32> to vector<8x32xf32>
    %15 = vector.shape_cast %14 : vector<8x32xf32> to vector<1x8x32xf32>
    %16 = vector.shape_cast %12 : vector<8x32xf32> to vector<8x1x32xf32>
    %17 = vector.broadcast %16 : vector<8x1x32xf32> to vector<8x8x32xf32>
    %18 = arith.addf %17, %7 : vector<8x8x32xf32>
    %19 = vector.broadcast %15 : vector<1x8x32xf32> to vector<8x8x32xf32>
    %20 = arith.mulf %19, %18 : vector<8x8x32xf32>
    %c0_14 = arith.constant 0 : index
    %c0_15 = arith.constant 0 : index
    %c0_16 = arith.constant 0 : index
    %c0_17 = arith.constant 0 : index
    %21 = vector.load %arg6[%c0_14, %c0_15, %c0_16, %c0_17] : memref<1x8x8x1xbf16, #tpu.memory_space<vmem>>, vector<1x8x8x1xbf16>
    %22 = vector.shape_cast %21 : vector<1x8x8x1xbf16> to vector<8x8x1xbf16>
    %23 = arith.extf %22 : vector<8x8x1xbf16> to vector<8x8x1xf32>
    %24 = vector.broadcast %23 : vector<8x8x1xf32> to vector<8x8x32xf32>
    %25 = arith.addf %20, %24 : vector<8x8x32xf32>
    %c0_18 = arith.constant 0 : index
    %c0_19 = arith.constant 0 : index
    %26 = vector.load %arg18[%c0_18, %c0_19] : memref<8x32xf32, #tpu.memory_space<vmem>>, vector<8x32xf32>
    %cst_20 = arith.constant dense<0xFF800000> : vector<8x32xf32>
    %27 = vector.multi_reduction <maximumf>, %25, %cst_20 [1] : vector<8x8x32xf32> to vector<8x32xf32>
    %28 = arith.maximumf %26, %27 : vector<8x32xf32>
    %29 = arith.subf %26, %28 : vector<8x32xf32>
    %30 = math.exp %29 : vector<8x32xf32>
    %31 = vector.shape_cast %28 : vector<8x32xf32> to vector<8x1x32xf32>
    %32 = vector.broadcast %31 : vector<8x1x32xf32> to vector<8x8x32xf32>
    %33 = arith.subf %25, %32 : vector<8x8x32xf32>
    %34 = math.exp %33 : vector<8x8x32xf32>
    %c0_21 = arith.constant 0 : index
    %c0_22 = arith.constant 0 : index
    %35 = vector.load %arg19[%c0_21, %c0_22] : memref<8x32xf32, #tpu.memory_space<vmem>>, vector<8x32xf32>
    %36 = arith.mulf %30, %35 : vector<8x32xf32>
    %cst_23 = arith.constant dense<0.000000e+00> : vector<8x32xf32>
    %37 = vector.multi_reduction <add>, %34, %cst_23 [1] : vector<8x8x32xf32> to vector<8x32xf32>
    %38 = arith.addf %36, %37 : vector<8x32xf32>
    %c0_24 = arith.constant 0 : index
    %c0_25 = arith.constant 0 : index
    %39 = vector.load %arg19[%c0_24, %c0_25] : memref<8x32xf32, #tpu.memory_space<vmem>>, vector<8x32xf32>
    tpu.vector_store %arg19[%c0_24, %c0_25], %38 {strides = array<i32>} : memref<8x32xf32, #tpu.memory_space<vmem>>, vector<8x32xf32>,
    %c0_26 = arith.constant 0 : index
    %c0_27 = arith.constant 0 : index
    %40 = vector.load %arg20[%c0_26, %c0_27] : memref<8x32xf32, #tpu.memory_space<vmem>>, vector<8x32xf32>
    %41 = arith.mulf %30, %40 : vector<8x32xf32>
    %42 = arith.mulf %34, %10 : vector<8x8x32xf32>
    %cst_28 = arith.constant dense<0.000000e+00> : vector<8x32xf32>
    %43 = vector.multi_reduction <add>, %42, %cst_28 [1] : vector<8x8x32xf32> to vector<8x32xf32>
    %44 = arith.addf %41, %43 : vector<8x32xf32>
    %c0_29 = arith.constant 0 : index
    %c0_30 = arith.constant 0 : index
    %45 = vector.load %arg20[%c0_29, %c0_30] : memref<8x32xf32, #tpu.memory_space<vmem>>, vector<8x32xf32>
    tpu.vector_store %arg20[%c0_29, %c0_30], %44 {strides = array<i32>} : memref<8x32xf32, #tpu.memory_space<vmem>>, vector<8x32xf32>,
    %c0_31 = arith.constant 0 : index
    %c0_32 = arith.constant 0 : index
    %46 = vector.load %arg18[%c0_31, %c0_32] : memref<8x32xf32, #tpu.memory_space<vmem>>, vector<8x32xf32>
    tpu.vector_store %arg18[%c0_31, %c0_32], %28 {strides = array<i32>} : memref<8x32xf32, #tpu.memory_space<vmem>>, vector<8x32xf32>,
    %c0_i32_33 = arith.constant 0 : i32
    %47 = arith.cmpi eq, %arg2, %c0_i32_33 : i32
    %48 = arith.extui %47 : i1 to i32
    %c0_i32_34 = arith.constant 0 : i32
    %49 = arith.cmpi ne, %48, %c0_i32_34 : i32
    scf.if %49 {
      %c0_35 = arith.constant 0 : index
      %c0_36 = arith.constant 0 : index
      %50 = vector.load %arg17[%c0_35, %c0_36] : memref<8x96xf32, #tpu.memory_space<vmem>>, vector<8x96xf32>
      %51 = vector.extract_strided_slice %50 {offsets = [0, 32], sizes = [8, 32], strides = [1, 1]} : vector<8x96xf32> to vector<8x32xf32>
      %52 = vector.extract_strided_slice %50 {offsets = [0, 64], sizes = [8, 32], strides = [1, 1]} : vector<8x96xf32> to vector<8x32xf32>
      %53 = arith.addf %52, %51 : vector<8x32xf32>
      %c0_37 = arith.constant 0 : index
      %c0_38 = arith.constant 0 : index
      %54 = vector.load %arg20[%c0_37, %c0_38] : memref<8x32xf32, #tpu.memory_space<vmem>>, vector<8x32xf32>
      %c0_39 = arith.constant 0 : index
      %c0_40 = arith.constant 0 : index
      %55 = vector.load %arg19[%c0_39, %c0_40] : memref<8x32xf32, #tpu.memory_space<vmem>>, vector<8x32xf32>
      %56 = tpu.reciprocal %55 {approx = true} : vector<8x32xf32> -> vector<8x32xf32>
      %57 = arith.mulf %54, %56 : vector<8x32xf32>
      %58 = arith.addf %53, %57 : vector<8x32xf32>
      %c0_41 = arith.constant 0 : index
      %c0_42 = arith.constant 0 : index
      %59 = vector.load %arg10[%c0_41, %c0_42] : memref<1x32xf32, #tpu.memory_space<vmem>>, vector<1x32xf32>
      %c0_43 = arith.constant 0 : index
      %c0_44 = arith.constant 0 : index
      %60 = vector.load %arg11[%c0_43, %c0_44] : memref<1x32xf32, #tpu.memory_space<vmem>>, vector<1x32xf32>
      %cst_45 = arith.constant dense<0.000000e+00> : vector<8xf32>
      %61 = vector.multi_reduction <add>, %58, %cst_45 [1] : vector<8x32xf32> to vector<8xf32>
      %62 = vector.shape_cast %61 : vector<8xf32> to vector<8x1xf32>
      %cst_46 = arith.constant 3.200000e+01 : f32
      %63 = vector.broadcast %cst_46 : f32 to vector<8x1xf32>
      %64 = arith.divf %62, %63 : vector<8x1xf32>
      %65 = vector.broadcast %64 : vector<8x1xf32> to vector<8x32xf32>
      %66 = arith.subf %58, %65 : vector<8x32xf32>
      %67 = arith.mulf %66, %66 : vector<8x32xf32>
      %cst_47 = arith.constant dense<0.000000e+00> : vector<8xf32>
      %68 = vector.multi_reduction <add>, %67, %cst_47 [1] : vector<8x32xf32> to vector<8xf32>
      %69 = vector.shape_cast %68 : vector<8xf32> to vector<8x1xf32>
      %cst_48 = arith.constant 3.200000e+01 : f32
      %70 = vector.broadcast %cst_48 : f32 to vector<8x1xf32>
      %71 = arith.divf %69, %70 : vector<8x1xf32>
      %72 = vector.broadcast %64 : vector<8x1xf32> to vector<8x32xf32>
      %73 = arith.subf %58, %72 : vector<8x32xf32>
      %cst_49 = arith.constant 9.99999974E-6 : f32
      %74 = vector.broadcast %cst_49 : f32 to vector<8x1xf32>
      %75 = arith.addf %71, %74 : vector<8x1xf32>
      %76 = math.rsqrt %75 : vector<8x1xf32>
      %77 = vector.broadcast %76 : vector<8x1xf32> to vector<8x32xf32>
      %78 = arith.mulf %73, %77 : vector<8x32xf32>
      %79 = vector.broadcast %59 : vector<1x32xf32> to vector<8x32xf32>
      %80 = arith.mulf %78, %79 : vector<8x32xf32>
      %81 = vector.broadcast %60 : vector<1x32xf32> to vector<8x32xf32>
      %82 = arith.addf %80, %81 : vector<8x32xf32>
      %c0_50 = arith.constant 0 : index
      %c0_51 = arith.constant 0 : index
      %83 = vector.load %arg12[%c0_50, %c0_51] : memref<32x64xf32, #tpu.memory_space<vmem>>, vector<32x64xf32>
      %cst_52 = arith.constant dense<0.000000e+00> : vector<8x64xf32>
      %84 = tpu.matmul %82, %83, %cst_52 {dimension_numbers = #tpu.dot_dimension_numbers<[1], [0], [0], [1], [0, 0, 1, 1], [], []>} : vector<8x32xf32>, vector<32x64xf32>, vector<8x64xf32> -> vector<8x64xf32>
      %c0_53 = arith.constant 0 : index
      %c0_54 = arith.constant 0 : index
      %85 = vector.load %arg13[%c0_53, %c0_54] : memref<1x64xf32, #tpu.memory_space<vmem>>, vector<1x64xf32>
      %86 = vector.broadcast %85 : vector<1x64xf32> to vector<8x64xf32>
      %87 = arith.addf %84, %86 : vector<8x64xf32>
      %cst_55 = arith.constant 0.000000e+00 : f32
      %88 = vector.broadcast %cst_55 : f32 to vector<8x64xf32>
      %89 = arith.maximumf %87, %88 : vector<8x64xf32>
      %c0_56 = arith.constant 0 : index
      %c0_57 = arith.constant 0 : index
      %90 = vector.load %arg14[%c0_56, %c0_57] : memref<64x32xf32, #tpu.memory_space<vmem>>, vector<64x32xf32>
      %cst_58 = arith.constant dense<0.000000e+00> : vector<8x32xf32>
      %91 = tpu.matmul %89, %90, %cst_58 {dimension_numbers = #tpu.dot_dimension_numbers<[1], [0], [0], [1], [0, 0, 1, 1], [], []>} : vector<8x64xf32>, vector<64x32xf32>, vector<8x32xf32> -> vector<8x32xf32>
      %c0_59 = arith.constant 0 : index
      %c0_60 = arith.constant 0 : index
      %92 = vector.load %arg15[%c0_59, %c0_60] : memref<1x32xf32, #tpu.memory_space<vmem>>, vector<1x32xf32>
      %93 = vector.broadcast %92 : vector<1x32xf32> to vector<8x32xf32>
      %94 = arith.addf %91, %93 : vector<8x32xf32>
      %95 = arith.addf %82, %94 : vector<8x32xf32>
      %cst_61 = arith.constant dense<0.000000e+00> : vector<8xf32>
      %96 = vector.multi_reduction <add>, %95, %cst_61 [1] : vector<8x32xf32> to vector<8xf32>
      %97 = vector.shape_cast %96 : vector<8xf32> to vector<8x1xf32>
      %cst_62 = arith.constant 3.200000e+01 : f32
      %98 = vector.broadcast %cst_62 : f32 to vector<8x1xf32>
      %99 = arith.divf %97, %98 : vector<8x1xf32>
      %100 = vector.broadcast %99 : vector<8x1xf32> to vector<8x32xf32>
      %101 = arith.subf %95, %100 : vector<8x32xf32>
      %102 = arith.mulf %101, %101 : vector<8x32xf32>
      %cst_63 = arith.constant dense<0.000000e+00> : vector<8xf32>
      %103 = vector.multi_reduction <add>, %102, %cst_63 [1] : vector<8x32xf32> to vector<8xf32>
      %104 = vector.shape_cast %103 : vector<8xf32> to vector<8x1xf32>
      %cst_64 = arith.constant 3.200000e+01 : f32
      %105 = vector.broadcast %cst_64 : f32 to vector<8x1xf32>
      %106 = arith.divf %104, %105 : vector<8x1xf32>
      %107 = vector.broadcast %99 : vector<8x1xf32> to vector<8x32xf32>
      %108 = arith.subf %95, %107 : vector<8x32xf32>
      %cst_65 = arith.constant 9.99999974E-6 : f32
      %109 = vector.broadcast %cst_65 : f32 to vector<8x1xf32>
      %110 = arith.addf %106, %109 : vector<8x1xf32>
      %111 = math.rsqrt %110 : vector<8x1xf32>
      %112 = vector.broadcast %111 : vector<8x1xf32> to vector<8x32xf32>
      %113 = arith.mulf %108, %112 : vector<8x32xf32>
      %114 = vector.broadcast %59 : vector<1x32xf32> to vector<8x32xf32>
      %115 = arith.mulf %113, %114 : vector<8x32xf32>
      %116 = vector.broadcast %60 : vector<1x32xf32> to vector<8x32xf32>
      %117 = arith.addf %115, %116 : vector<8x32xf32>
      %c0_66 = arith.constant 0 : index
      %c0_67 = arith.constant 0 : index
      %c0_68 = arith.constant 0 : index
      %118 = vector.load %arg16[%c0_66, %c0_67, %c0_68] : memref<1x8x32xf32, #tpu.memory_space<vmem>>, vector<1x8x32xf32>
      %119 = vector.shape_cast %118 : vector<1x8x32xf32> to vector<8x32xf32>
      %120 = vector.shape_cast %117 : vector<8x32xf32> to vector<1x8x32xf32>
      tpu.vector_store %arg16[%c0_66, %c0_67, %c0_68], %120 {strides = array<i32>} : memref<1x8x32xf32, #tpu.memory_space<vmem>>, vector<1x8x32xf32>,
    } else {
    }
    return
  }
  func.func @transform_0(%arg0: i32, %arg1: i32, %arg2: i32) -> (i32, i32, i32) {
    %c0_i32 = arith.constant 0 : i32
    %c0_i32_0 = arith.constant 0 : i32
    return %arg0, %arg1, %c0_i32 : i32, i32, i32
  }
  func.func @transform_1(%arg0: i32, %arg1: i32, %arg2: i32) -> (i32, i32, i32) {
    %c0_i32 = arith.constant 0 : i32
    %c0_i32_0 = arith.constant 0 : i32
    return %arg0, %arg2, %c0_i32 : i32, i32, i32
  }
  func.func @transform_2(%arg0: i32, %arg1: i32, %arg2: i32) -> (i32, i32, i32, i32) {
    %c0_i32 = arith.constant 0 : i32
    %c0_i32_0 = arith.constant 0 : i32
    return %arg0, %arg2, %arg1, %c0_i32 : i32, i32, i32, i32
  }
  func.func @transform_3(%arg0: i32, %arg1: i32, %arg2: i32) -> (i32, i32, i32, i32) {
    %c0_i32 = arith.constant 0 : i32
    %c0_i32_0 = arith.constant 0 : i32
    return %arg0, %arg1, %arg2, %c0_i32 : i32, i32, i32, i32
  }
  func.func @transform_4(%arg0: i32, %arg1: i32, %arg2: i32) -> (i32, i32) {
    %c0_i32 = arith.constant 0 : i32
    %c0_i32_0 = arith.constant 0 : i32
    %c0_i32_1 = arith.constant 0 : i32
    return %c0_i32, %c0_i32_0 : i32, i32
  }
  func.func @transform_5(%arg0: i32, %arg1: i32, %arg2: i32) -> (i32, i32) {
    %c0_i32 = arith.constant 0 : i32
    %c0_i32_0 = arith.constant 0 : i32
    %c0_i32_1 = arith.constant 0 : i32
    return %c0_i32, %c0_i32_0 : i32, i32
  }
  func.func @transform_6(%arg0: i32, %arg1: i32, %arg2: i32) -> (i32, i32) {
    %c0_i32 = arith.constant 0 : i32
    %c0_i32_0 = arith.constant 0 : i32
    %c0_i32_1 = arith.constant 0 : i32
    return %c0_i32, %c0_i32_0 : i32, i32
  }
  func.func @transform_7(%arg0: i32, %arg1: i32, %arg2: i32) -> (i32, i32) {
    %c0_i32 = arith.constant 0 : i32
    %c0_i32_0 = arith.constant 0 : i32
    %c0_i32_1 = arith.constant 0 : i32
    return %c0_i32, %c0_i32_0 : i32, i32
  }
  func.func @transform_8(%arg0: i32, %arg1: i32, %arg2: i32) -> (i32, i32) {
    %c0_i32 = arith.constant 0 : i32
    %c0_i32_0 = arith.constant 0 : i32
    %c0_i32_1 = arith.constant 0 : i32
    return %c0_i32, %c0_i32_0 : i32, i32
  }
  func.func @transform_9(%arg0: i32, %arg1: i32, %arg2: i32) -> (i32, i32) {
    %c0_i32 = arith.constant 0 : i32
    %c0_i32_0 = arith.constant 0 : i32
    %c0_i32_1 = arith.constant 0 : i32
    return %c0_i32, %c0_i32_0 : i32, i32
  }
  func.func @transform_10(%arg0: i32, %arg1: i32, %arg2: i32) -> (i32, i32) {
    %c0_i32 = arith.constant 0 : i32
    %c0_i32_0 = arith.constant 0 : i32
    %c0_i32_1 = arith.constant 0 : i32
    return %c0_i32, %c0_i32_0 : i32, i32
  }
  func.func @transform_11(%arg0: i32, %arg1: i32, %arg2: i32) -> (i32, i32) {
    %c0_i32 = arith.constant 0 : i32
    %c0_i32_0 = arith.constant 0 : i32
    %c0_i32_1 = arith.constant 0 : i32
    return %c0_i32, %c0_i32_0 : i32, i32
  }
  func.func @transform_12(%arg0: i32, %arg1: i32, %arg2: i32) -> (i32, i32) {
    %c0_i32 = arith.constant 0 : i32
    %c0_i32_0 = arith.constant 0 : i32
    %c0_i32_1 = arith.constant 0 : i32
    return %c0_i32, %c0_i32_0 : i32, i32
  }
  func.func @transform_13(%arg0: i32, %arg1: i32, %arg2: i32) -> (i32, i32, i32) {
    %c0_i32 = arith.constant 0 : i32
    %c0_i32_0 = arith.constant 0 : i32
    return %arg0, %arg1, %c0_i32 : i32, i32, i32
  }
}

</mosaic_0001>

<llo_original>
// kernel: tpu_custom_call.1
$region0: #{tpu_custom_call.1}
  #allocation0 [shape = 'u32[]', space=smem, size = 0x4, offset = 0x4, fixed_abs, tag = 'smem constant byte address 0x4 - core index']
  #allocation1 [shape = 'u32[144,128]{1,0:T(1,128)}', space=vmem, size = 0x12000, scoped, tag = 'internal scratch']
  #allocation2 [shape = 'f32[8,96]{1,0:T(8,128)}', space=vmem, size = 0x1000, scoped, tag = 'scratch operand']
  #allocation3 [shape = 'f32[8,32]{1,0:T(8,128)}', space=vmem, size = 0x1000, scoped, tag = 'scratch operand']
  #allocation4 [shape = 'f32[8,32]{1,0:T(8,128)}', space=vmem, size = 0x1000, scoped, tag = 'scratch operand']
  #allocation5 [shape = 'f32[8,32]{1,0:T(8,128)}', space=vmem, size = 0x1000, scoped, tag = 'scratch operand']
  %s0 = inlined_call_operand.vmem [shape: f32[4,8,32], index: 0, kind: input, shape index: {}]
  %s1 = inlined_call_operand.vmem [shape: f32[4,8,32], index: 1, kind: input, shape index: {}]
  %s2 = inlined_call_operand.vmem [shape: bf16[4,1,64,32], index: 2, kind: input, shape index: {}]
  %s3 = inlined_call_operand.vmem [shape: bf16[4,8,8,1], index: 3, kind: input, shape index: {}]
  %s4 = inlined_call_operand.vmem [shape: f32[32,96], index: 4, kind: input, shape index: {}]
  %s5 = inlined_call_operand.vmem [shape: bf16[32,32], index: 5, kind: input, shape index: {}]
  %s6 = inlined_call_operand.vmem [shape: bf16[32,32], index: 6, kind: input, shape index: {}]
  %s7 = inlined_call_operand.vmem [shape: f32[1,32], index: 7, kind: input, shape index: {}]
  %s8 = inlined_call_operand.vmem [shape: f32[1,32], index: 8, kind: input, shape index: {}]
  %s9 = inlined_call_operand.vmem [shape: f32[32,64], index: 9, kind: input, shape index: {}]
  %s10 = inlined_call_operand.vmem [shape: f32[1,64], index: 10, kind: input, shape index: {}]
  %s11 = inlined_call_operand.vmem [shape: f32[64,32], index: 11, kind: input, shape index: {}]
  %s12 = inlined_call_operand.vmem [shape: f32[1,32], index: 12, kind: input, shape index: {}]
  %s13 = inlined_call_operand.hbm [shape: f32[4,8,32], index: 13, kind: output, shape index: {}]
  %s14 = sld [smem:[#allocation0]]
  $region93: #{tpu_custom_call.1} parent=0
    _
  %s16 = ssub.s32 1, %s14
  %s17 = scalar_select 0, %s16, %s14
  $region1: #{tpu_custom_call.1} parent=0
    #allocation6 [shape = 'u8[8192]{0}', space=vmem, size = 0x2000, scoped, tag = 'output window, operand 0']
    #allocation7 [shape = 's32[2]{0}', space=sflag, size = 0x8, scoped, tag = 'scoped memory for tpu_custom_call.1']
    %18 = vsyncpa [#allocation7], 0
    %s19 = scalar_lea.sflag [#allocation7], 1
    %20 = vsyncpa %s19, 0
    loop: start=0, step=1, limit=6
    $region2: #{tpu_custom_call.1} parent=1 // loop_pre_header
      _
    $region3: #{tpu_custom_call.1} parent=1 // loop_header
      %s22 = sphi 0, %s26
      %p23 = scmp.ge.s32.totalorder %s22, 6
      %s29 = sphi 0, %s48
      %s30 = sphi 0, %s44
      %s31 = sphi 0, %s40
      %s32 = sphi 0, %s29
      %s33 = sphi 0, %s30
      %s34 = sphi 0, %s31
      %s35 = sphi 0, %s32
      %s36 = sphi 0, %s33
      %s37 = sphi 0, %s34
      %s53 = sphi 0, %s55
      %s56 = sphi 0, %s53
      %s57 = sphi 0, %s56
      %s73 = sphi 0, %s57
      %s81 = sphi 0, %s83
      %s84 = sphi 0, %s81
      %s85 = sphi 0, %s84
      %s101 = sphi 0, %s85
      %s111 = sphi 0, %s113
      %s114 = sphi 0, %s111
      %s115 = sphi 0, %s114
      %s131 = sphi 0, %s115
      %s141 = sphi 0, %s143
      %s144 = sphi 0, %s141
      %s145 = sphi 0, %s144
      %s161 = sphi 0, %s145
      %s165 = sphi 0, %s165
      %s167 = sphi 0, %s165
      %s168 = sphi 0, %s167
      %s182 = sphi 0, %s168
      %s186 = sphi 0, %s186
      %s188 = sphi 0, %s186
      %s189 = sphi 0, %s188
      %s203 = sphi 0, %s189
      %s207 = sphi 0, %s207
      %s209 = sphi 0, %s207
      %s210 = sphi 0, %s209
      %s224 = sphi 0, %s210
      %s228 = sphi 0, %s228
      %s230 = sphi 0, %s228
      %s231 = sphi 0, %s230
      %s245 = sphi 0, %s231
      %s249 = sphi 0, %s249
      %s251 = sphi 0, %s249
      %s252 = sphi 0, %s251
      %s266 = sphi 0, %s252
      %s270 = sphi 0, %s270
      %s272 = sphi 0, %s270
      %s273 = sphi 0, %s272
      %s287 = sphi 0, %s273
      %s291 = sphi 0, %s291
      %s293 = sphi 0, %s291
      %s294 = sphi 0, %s293
      %s308 = sphi 0, %s294
      %s312 = sphi 0, %s312
      %s314 = sphi 0, %s312
      %s315 = sphi 0, %s314
      %s329 = sphi 0, %s315
      %s333 = sphi 0, %s333
      %s335 = sphi 0, %s333
      %s336 = sphi 0, %s335
      %s350 = sphi 0, %s336
      %s358 = sphi 0, %s360
      %s361 = sphi 0, %s358
      %s362 = sphi 0, %s361
      %s378 = sphi 0, %s362
    $region4: #{tpu_custom_call.1} parent=1 // loop_header_branch
      %25 = sbr.rel (%p23) target = $region8
    $region5: #{tpu_custom_call.1} parent=1 // loop_body
      %s27 = ssub.s32 %s22, 1
      %s28 = ssub.s32 %s22, 2
      %s38 = sadd.s32 1, %s31
      %p39 = scmp.ge.s32.totalorder %s38, 1
      %s40 = scalar_select %p39, 0, %s38
      %s41 = sadd.s32 1, %s30
      %s42 = scalar_select %p39, %s41, %s30
      %p43 = scmp.ge.s32.totalorder %s42, 1
      %s44 = scalar_select %p43, 0, %s42
      %s45 = sadd.s32 1, %s29
      %s46 = scalar_select %p43, %s45, %s29
      %p47 = scmp.ge.s32.totalorder %s46, 4
      %s48 = scalar_select %p47, 0, %s46
      %s49 = ssub.s32 %s29, %s48
      %s50 = ssub.s32 %s30, %s44
      %s51 = sor.u32 %s49, %s50
      %p52 = scmp.eq.s32.totalorder %s51, 0
      %s54 = sadd.s32 %s53, 1
      %s55 = scalar_select %p52, %s53, %s54
      %p58 = pneg %p52
      %p59 = scmp.eq.s32.totalorder %s22, 3
      %p60 = por %p58, %p59
      %p61 = scmp.ne.s32.totalorder %s53, %s56
      %p62 = scmp.eq.s32.totalorder %s22, 0
      %p63 = por %p61, %p62
      %p64 = scmp.ne.s32.totalorder %s53, %s56
      %p65 = scmp.eq.s32.totalorder %s27, 3
      %p66 = por %p64, %p65
      %p67 = scmp.ne.s32.totalorder %s56, %s57
      %p68 = scmp.eq.s32.totalorder %s27, 0
      %p69 = por %p67, %p68
      %p70 = scmp.ne.s32.totalorder %s56, %s57
      %p71 = scmp.eq.s32.totalorder %s28, 3
      %p72 = por %p70, %p71
      %p74 = scmp.ne.s32.totalorder %s57, %s73
      %p75 = scmp.eq.s32.totalorder %s28, 0
      %p76 = por %p74, %p75
      %s77 = ssub.s32 %s29, %s48
      %s78 = ssub.s32 %s31, %s40
      %s79 = sor.u32 %s77, %s78
      %p80 = scmp.eq.s32.totalorder %s79, 0
      %s82 = sadd.s32 %s81, 1
      %s83 = scalar_select %p80, %s81, %s82
      %p86 = pneg %p80
      %p87 = scmp.eq.s32.totalorder %s22, 3
      %p88 = por %p86, %p87
      %p89 = scmp.ne.s32.totalorder %s81, %s84
      %p90 = scmp.eq.s32.totalorder %s22, 0
      %p91 = por %p89, %p90
      %p92 = scmp.ne.s32.totalorder %s81, %s84
      %p93 = scmp.eq.s32.totalorder %s27, 3
      %p94 = por %p92, %p93
      %p95 = scmp.ne.s32.totalorder %s84, %s85
      %p96 = scmp.eq.s32.totalorder %s27, 0
      %p97 = por %p95, %p96
      %p98 = scmp.ne.s32.totalorder %s84, %s85
      %p99 = scmp.eq.s32.totalorder %s28, 3
      %p100 = por %p98, %p99
      %p102 = scmp.ne.s32.totalorder %s85, %s101
      %p103 = scmp.eq.s32.totalorder %s28, 0
      %p104 = por %p102, %p103
      %s105 = ssub.s32 %s29, %s48
      %s106 = ssub.s32 %s31, %s40
      %s107 = sor.u32 %s105, %s106
      %s108 = ssub.s32 %s30, %s44
      %s109 = sor.u32 %s107, %s108
      %p110 = scmp.eq.s32.totalorder %s109, 0
      %s112 = sadd.s32 %s111, 1
      %s113 = scalar_select %p110, %s111, %s112
      %p116 = pneg %p110
      %p117 = scmp.eq.s32.totalorder %s22, 3
      %p118 = por %p116, %p117
      %p119 = scmp.ne.s32.totalorder %s111, %s114
      %p120 = scmp.eq.s32.totalorder %s22, 0
      %p121 = por %p119, %p120
      %p122 = scmp.ne.s32.totalorder %s111, %s114
      %p123 = scmp.eq.s32.totalorder %s27, 3
      %p124 = por %p122, %p123
      %p125 = scmp.ne.s32.totalorder %s114, %s115
      %p126 = scmp.eq.s32.totalorder %s27, 0
      %p127 = por %p125, %p126
      %p128 = scmp.ne.s32.totalorder %s114, %s115
      %p129 = scmp.eq.s32.totalorder %s28, 3
      %p130 = por %p128, %p129
      %p132 = scmp.ne.s32.totalorder %s115, %s131
      %p133 = scmp.eq.s32.totalorder %s28, 0
      %p134 = por %p132, %p133
      %s135 = ssub.s32 %s29, %s48
      %s136 = ssub.s32 %s30, %s44
      %s137 = sor.u32 %s135, %s136
      %s138 = ssub.s32 %s31, %s40
      %s139 = sor.u32 %s137, %s138
      %p140 = scmp.eq.s32.totalorder %s139, 0
      %s142 = sadd.s32 %s141, 1
      %s143 = scalar_select %p140, %s141, %s142
      %p146 = pneg %p140
      %p147 = scmp.eq.s32.totalorder %s22, 3
      %p148 = por %p146, %p147
      %p149 = scmp.ne.s32.totalorder %s141, %s144
      %p150 = scmp.eq.s32.totalorder %s22, 0
      %p151 = por %p149, %p150
      %p152 = scmp.ne.s32.totalorder %s141, %s144
      %p153 = scmp.eq.s32.totalorder %s27, 3
      %p154 = por %p152, %p153
      %p155 = scmp.ne.s32.totalorder %s144, %s145
      %p156 = scmp.eq.s32.totalorder %s27, 0
      %p157 = por %p155, %p156
      %p158 = scmp.ne.s32.totalorder %s144, %s145
      %p159 = scmp.eq.s32.totalorder %s28, 3
      %p160 = por %p158, %p159
      %p162 = scmp.ne.s32.totalorder %s145, %s161
      %p163 = scmp.eq.s32.totalorder %s28, 0
      %p164 = por %p162, %p163
      %s166 = sadd.s32 %s165, 1
      %p169 = scmp.eq.s32.totalorder %s22, 3
      %p170 = scmp.ne.s32.totalorder %s165, %s167
      %p171 = scmp.eq.s32.totalorder %s22, 0
      %p172 = por %p170, %p171
      %p173 = scmp.ne.s32.totalorder %s165, %s167
      %p174 = scmp.eq.s32.totalorder %s27, 3
      %p175 = por %p173, %p174
      %p176 = scmp.ne.s32.totalorder %s167, %s168
      %p177 = scmp.eq.s32.totalorder %s27, 0
      %p178 = por %p176, %p177
      %p179 = scmp.ne.s32.totalorder %s167, %s168
      %p180 = scmp.eq.s32.totalorder %s28, 3
      %p181 = por %p179, %p180
      %p183 = scmp.ne.s32.totalorder %s168, %s182
      %p184 = scmp.eq.s32.totalorder %s28, 0
      %p185 = por %p183, %p184
      %s187 = sadd.s32 %s186, 1
      %p190 = scmp.eq.s32.totalorder %s22, 3
      %p191 = scmp.ne.s32.totalorder %s186, %s188
      %p192 = scmp.eq.s32.totalorder %s22, 0
      %p193 = por %p191, %p192
      %p194 = scmp.ne.s32.totalorder %s186, %s188
      %p195 = scmp.eq.s32.totalorder %s27, 3
      %p196 = por %p194, %p195
      %p197 = scmp.ne.s32.totalorder %s188, %s189
      %p198 = scmp.eq.s32.totalorder %s27, 0
      %p199 = por %p197, %p198
      %p200 = scmp.ne.s32.totalorder %s188, %s189
      %p201 = scmp.eq.s32.totalorder %s28, 3
      %p202 = por %p200, %p201
      %p204 = scmp.ne.s32.totalorder %s189, %s203
      %p205 = scmp.eq.s32.totalorder %s28, 0
      %p206 = por %p204, %p205
      %s208 = sadd.s32 %s207, 1
      %p211 = scmp.eq.s32.totalorder %s22, 3
      %p212 = scmp.ne.s32.totalorder %s207, %s209
      %p213 = scmp.eq.s32.totalorder %s22, 0
      %p214 = por %p212, %p213
      %p215 = scmp.ne.s32.totalorder %s207, %s209
      %p216 = scmp.eq.s32.totalorder %s27, 3
      %p217 = por %p215, %p216
      %p218 = scmp.ne.s32.totalorder %s209, %s210
      %p219 = scmp.eq.s32.totalorder %s27, 0
      %p220 = por %p218, %p219
      %p221 = scmp.ne.s32.totalorder %s209, %s210
      %p222 = scmp.eq.s32.totalorder %s28, 3
      %p223 = por %p221, %p222
      %p225 = scmp.ne.s32.totalorder %s210, %s224
      %p226 = scmp.eq.s32.totalorder %s28, 0
      %p227 = por %p225, %p226
      %s229 = sadd.s32 %s228, 1
      %p232 = scmp.eq.s32.totalorder %s22, 3
      %p233 = scmp.ne.s32.totalorder %s228, %s230
      %p234 = scmp.eq.s32.totalorder %s22, 0
      %p235 = por %p233, %p234
      %p236 = scmp.ne.s32.totalorder %s228, %s230
      %p237 = scmp.eq.s32.totalorder %s27, 3
      %p238 = por %p236, %p237
      %p239 = scmp.ne.s32.totalorder %s230, %s231
      %p240 = scmp.eq.s32.totalorder %s27, 0
      %p241 = por %p239, %p240
      %p242 = scmp.ne.s32.totalorder %s230, %s231
      %p243 = scmp.eq.s32.totalorder %s28, 3
      %p244 = por %p242, %p243
      %p246 = scmp.ne.s32.totalorder %s231, %s245
      %p247 = scmp.eq.s32.totalorder %s28, 0
      %p248 = por %p246, %p247
      %s250 = sadd.s32 %s249, 1
      %p253 = scmp.eq.s32.totalorder %s22, 3
      %p254 = scmp.ne.s32.totalorder %s249, %s251
      %p255 = scmp.eq.s32.totalorder %s22, 0
      %p256 = por %p254, %p255
      %p257 = scmp.ne.s32.totalorder %s249, %s251
      %p258 = scmp.eq.s32.totalorder %s27, 3
      %p259 = por %p257, %p258
      %p260 = scmp.ne.s32.totalorder %s251, %s252
      %p261 = scmp.eq.s32.totalorder %s27, 0
      %p262 = por %p260, %p261
      %p263 = scmp.ne.s32.totalorder %s251, %s252
      %p264 = scmp.eq.s32.totalorder %s28, 3
      %p265 = por %p263, %p264
      %p267 = scmp.ne.s32.totalorder %s252, %s266
      %p268 = scmp.eq.s32.totalorder %s28, 0
      %p269 = por %p267, %p268
      %s271 = sadd.s32 %s270, 1
      %p274 = scmp.eq.s32.totalorder %s22, 3
      %p275 = scmp.ne.s32.totalorder %s270, %s272
      %p276 = scmp.eq.s32.totalorder %s22, 0
      %p277 = por %p275, %p276
      %p278 = scmp.ne.s32.totalorder %s270, %s272
      %p279 = scmp.eq.s32.totalorder %s27, 3
      %p280 = por %p278, %p279
      %p281 = scmp.ne.s32.totalorder %s272, %s273
      %p282 = scmp.eq.s32.totalorder %s27, 0
      %p283 = por %p281, %p282
      %p284 = scmp.ne.s32.totalorder %s272, %s273
      %p285 = scmp.eq.s32.totalorder %s28, 3
      %p286 = por %p284, %p285
      %p288 = scmp.ne.s32.totalorder %s273, %s287
      %p289 = scmp.eq.s32.totalorder %s28, 0
      %p290 = por %p288, %p289
      %s292 = sadd.s32 %s291, 1
      %p295 = scmp.eq.s32.totalorder %s22, 3
      %p296 = scmp.ne.s32.totalorder %s291, %s293
      %p297 = scmp.eq.s32.totalorder %s22, 0
      %p298 = por %p296, %p297
      %p299 = scmp.ne.s32.totalorder %s291, %s293
      %p300 = scmp.eq.s32.totalorder %s27, 3
      %p301 = por %p299, %p300
      %p302 = scmp.ne.s32.totalorder %s293, %s294
      %p303 = scmp.eq.s32.totalorder %s27, 0
      %p304 = por %p302, %p303
      %p305 = scmp.ne.s32.totalorder %s293, %s294
      %p306 = scmp.eq.s32.totalorder %s28, 3
      %p307 = por %p305, %p306
      %p309 = scmp.ne.s32.totalorder %s294, %s308
      %p310 = scmp.eq.s32.totalorder %s28, 0
      %p311 = por %p309, %p310
      %s313 = sadd.s32 %s312, 1
      %p316 = scmp.eq.s32.totalorder %s22, 3
      %p317 = scmp.ne.s32.totalorder %s312, %s314
      %p318 = scmp.eq.s32.totalorder %s22, 0
      %p319 = por %p317, %p318
      %p320 = scmp.ne.s32.totalorder %s312, %s314
      %p321 = scmp.eq.s32.totalorder %s27, 3
      %p322 = por %p320, %p321
      %p323 = scmp.ne.s32.totalorder %s314, %s315
      %p324 = scmp.eq.s32.totalorder %s27, 0
      %p325 = por %p323, %p324
      %p326 = scmp.ne.s32.totalorder %s314, %s315
      %p327 = scmp.eq.s32.totalorder %s28, 3
      %p328 = por %p326, %p327
      %p330 = scmp.ne.s32.totalorder %s315, %s329
      %p331 = scmp.eq.s32.totalorder %s28, 0
      %p332 = por %p330, %p331
      %s334 = sadd.s32 %s333, 1
      %p337 = scmp.eq.s32.totalorder %s22, 3
      %p338 = scmp.ne.s32.totalorder %s333, %s335
      %p339 = scmp.eq.s32.totalorder %s22, 0
      %p340 = por %p338, %p339
      %p341 = scmp.ne.s32.totalorder %s333, %s335
      %p342 = scmp.eq.s32.totalorder %s27, 3
      %p343 = por %p341, %p342
      %p344 = scmp.ne.s32.totalorder %s335, %s336
      %p345 = scmp.eq.s32.totalorder %s27, 0
      %p346 = por %p344, %p345
      %p347 = scmp.ne.s32.totalorder %s335, %s336
      %p348 = scmp.eq.s32.totalorder %s28, 3
      %p349 = por %p347, %p348
      %p351 = scmp.ne.s32.totalorder %s336, %s350
      %p352 = scmp.eq.s32.totalorder %s28, 0
      %p353 = por %p351, %p352
      %s354 = ssub.s32 %s29, %s48
      %s355 = ssub.s32 %s30, %s44
      %s356 = sor.u32 %s354, %s355
      %p357 = scmp.eq.s32.totalorder %s356, 0
      %s359 = sadd.s32 %s358, 1
      %s360 = scalar_select %p357, %s358, %s359
      %p363 = pneg %p357
      %p364 = scmp.eq.s32.totalorder %s22, 3
      %p365 = por %p363, %p364
      %p366 = scmp.ne.s32.totalorder %s358, %s361
      %p367 = scmp.eq.s32.totalorder %s22, 0
      %p368 = por %p366, %p367
      %p369 = scmp.ne.s32.totalorder %s358, %s361
      %p370 = scmp.eq.s32.totalorder %s27, 3
      %p371 = por %p369, %p370
      %p372 = scmp.ne.s32.totalorder %s361, %s362
      %p373 = scmp.eq.s32.totalorder %s27, 0
      %p374 = por %p372, %p373
      %p375 = scmp.ne.s32.totalorder %s361, %s362
      %p376 = scmp.eq.s32.totalorder %s28, 3
      %p377 = por %p375, %p376
      %p379 = scmp.ne.s32.totalorder %s362, %s378
      %p380 = scmp.eq.s32.totalorder %s28, 0
      %p381 = por %p379, %p380
      %p382 = scmp.le.s32.totalorder 1, %s22
      %p383 = scmp.lt.s32.totalorder %s22, 5
      %p384 = pnand %p382, %p383
      %p385 = pneg %p384
      // Predicated region
      $region9: #{tpu_custom_call.1} parent=5 // pred_check
        _
      $region10: #{tpu_custom_call.1} parent=5 // pred_check_branch
        %387 = sbr.rel (%p384) target = $region12
      $region11: #{tpu_custom_call.1} parent=5 // pred_region
        %s388 = ssub.s32 %s22, 1
        // Predicated region
        $region13: #{tpu_custom_call.1} parent=11 // pred_check
          %p389 = pneg %p178
        $region14: #{tpu_custom_call.1} parent=11 // pred_check_branch
          %391 = sbr.rel (%p389) target = $region16
        $region15: #{tpu_custom_call.1} parent=11 // pred_region
          _
        $region16: #{tpu_custom_call.1} parent=11 // pred_fallthru
          _
        // Predicated region
        $region17: #{tpu_custom_call.1} parent=11 // pred_check
          %p392 = pneg %p199
        $region18: #{tpu_custom_call.1} parent=11 // pred_check_branch
          %394 = sbr.rel (%p392) target = $region20
        $region19: #{tpu_custom_call.1} parent=11 // pred_region
          _
        $region20: #{tpu_custom_call.1} parent=11 // pred_fallthru
          _
        // Predicated region
        $region21: #{tpu_custom_call.1} parent=11 // pred_check
          %p395 = pneg %p220
        $region22: #{tpu_custom_call.1} parent=11 // pred_check_branch
          %397 = sbr.rel (%p395) target = $region24
        $region23: #{tpu_custom_call.1} parent=11 // pred_region
          _
        $region24: #{tpu_custom_call.1} parent=11 // pred_fallthru
          _
        // Predicated region
        $region25: #{tpu_custom_call.1} parent=11 // pred_check
          %p398 = pneg %p241
        $region26: #{tpu_custom_call.1} parent=11 // pred_check_branch
          %400 = sbr.rel (%p398) target = $region28
        $region27: #{tpu_custom_call.1} parent=11 // pred_region
          _
        $region28: #{tpu_custom_call.1} parent=11 // pred_fallthru
          _
        // Predicated region
        $region29: #{tpu_custom_call.1} parent=11 // pred_check
          %p401 = pneg %p262
        $region30: #{tpu_custom_call.1} parent=11 // pred_check_branch
          %403 = sbr.rel (%p401) target = $region32
        $region31: #{tpu_custom_call.1} parent=11 // pred_region
          _
        $region32: #{tpu_custom_call.1} parent=11 // pred_fallthru
          _
        // Predicated region
        $region33: #{tpu_custom_call.1} parent=11 // pred_check
          %p404 = pneg %p283
        $region34: #{tpu_custom_call.1} parent=11 // pred_check_branch
          %406 = sbr.rel (%p404) target = $region36
        $region35: #{tpu_custom_call.1} parent=11 // pred_region
          _
        $region36: #{tpu_custom_call.1} parent=11 // pred_fallthru
          _
        // Predicated region
        $region37: #{tpu_custom_call.1} parent=11 // pred_check
          %p407 = pneg %p304
        $region38: #{tpu_custom_call.1} parent=11 // pred_check_branch
          %409 = sbr.rel (%p407) target = $region40
        $region39: #{tpu_custom_call.1} parent=11 // pred_region
          _
        $region40: #{tpu_custom_call.1} parent=11 // pred_fallthru
          _
        // Predicated region
        $region41: #{tpu_custom_call.1} parent=11 // pred_check
          %p410 = pneg %p325
        $region42: #{tpu_custom_call.1} parent=11 // pred_check_branch
          %412 = sbr.rel (%p410) target = $region44
        $region43: #{tpu_custom_call.1} parent=11 // pred_region
          _
        $region44: #{tpu_custom_call.1} parent=11 // pred_fallthru
          _
        // Predicated region
        $region45: #{tpu_custom_call.1} parent=11 // pred_check
          %p413 = pneg %p346
        $region46: #{tpu_custom_call.1} parent=11 // pred_check_branch
          %415 = sbr.rel (%p413) target = $region48
        $region47: #{tpu_custom_call.1} parent=11 // pred_region
          _
        $region48: #{tpu_custom_call.1} parent=11 // pred_fallthru
          _
      $region12: #{tpu_custom_call.1} parent=5 // pred_fallthru
        _
      %p416 = scmp.lt.s32.totalorder %s22, 4
      // Predicated region
      $region49: #{tpu_custom_call.1} parent=5 // pred_check
        %p417 = pneg %p416
      $region50: #{tpu_custom_call.1} parent=5 // pred_check_branch
        %419 = sbr.rel (%p417) target = $region52
      $region51: #{tpu_custom_call.1} parent=5 // pred_region
        // Predicated region
        $region53: #{tpu_custom_call.1} parent=51 // pred_check
          %p420 = pneg %p63
        $region54: #{tpu_custom_call.1} parent=51 // pred_check_branch
          %422 = sbr.rel (%p420) target = $region56
        $region55: #{tpu_custom_call.1} parent=51 // pred_region
          %p423 = scmp.lt.s32.totalorder %s29, 3
          %s424 = scalar_select %p423, %s29, 3
          %p425 = scmp.lt.s32.totalorder %s30, 0
          %s426 = scalar_select %p425, %s30, 0
          %s427 = sadd.s32 %s426, %s424
          %s428 = smul.addr %s427, 8
          %s429 = scalar_lea.vmem %s0, %s428
        $region56: #{tpu_custom_call.1} parent=51 // pred_fallthru
          _
        // Predicated region
        $region57: #{tpu_custom_call.1} parent=51 // pred_check
          %p430 = pneg %p91
        $region58: #{tpu_custom_call.1} parent=51 // pred_check_branch
          %432 = sbr.rel (%p430) target = $region60
        $region59: #{tpu_custom_call.1} parent=51 // pred_region
          %p433 = scmp.lt.s32.totalorder %s29, 3
          %s434 = scalar_select %p433, %s29, 3
          %p435 = scmp.lt.s32.totalorder %s31, 0
          %s436 = scalar_select %p435, %s31, 0
          %s437 = sadd.s32 %s436, %s434
          %s438 = smul.addr %s437, 8
          %s439 = scalar_lea.vmem %s1, %s438
        $region60: #{tpu_custom_call.1} parent=51 // pred_fallthru
          _
        // Predicated region
        $region61: #{tpu_custom_call.1} parent=51 // pred_check
          %p440 = pneg %p121
        $region62: #{tpu_custom_call.1} parent=51 // pred_check_branch
          %442 = sbr.rel (%p440) target = $region64
        $region63: #{tpu_custom_call.1} parent=51 // pred_region
          %s443 = smul.u32 8, %s30
          %p444 = scmp.lt.s32.totalorder %s29, 3
          %s445 = scalar_select %p444, %s29, 3
          %p446 = scmp.lt.s32.totalorder %s31, 0
          %s447 = scalar_select %p446, %s31, 0
          %p448 = scmp.lt.s32.totalorder %s443, 7
          %s449 = scalar_select %p448, %s443, 7
          %s450 = smul.addr %s447, 8
          %s451 = sadd.s32 %s449, %s450
          %s452 = smul.addr %s445, 8
          %s453 = sadd.s32 %s451, %s452
          %s454 = smul.addr %s453, 4
          %s455 = scalar_lea.vmem %s2, %s454
          %s456 = smul.u32 8, %s30
        $region64: #{tpu_custom_call.1} parent=51 // pred_fallthru
          _
        // Predicated region
        $region65: #{tpu_custom_call.1} parent=51 // pred_check
          %p457 = pneg %p151
        $region66: #{tpu_custom_call.1} parent=51 // pred_check_branch
          %459 = sbr.rel (%p457) target = $region68
        $region67: #{tpu_custom_call.1} parent=51 // pred_region
          %s460 = smul.u32 8, %s30
          %p461 = scmp.lt.s32.totalorder %s29, 3
          %s462 = scalar_select %p461, %s29, 3
          %p463 = scmp.lt.s32.totalorder %s460, 7
          %s464 = scalar_select %p463, %s460, 7
          %p465 = scmp.lt.s32.totalorder %s31, 0
          %s466 = scalar_select %p465, %s31, 0
          %s467 = sadd.s32 %s466, %s464
          %s468 = smul.addr %s462, 8
          %s469 = sadd.s32 %s467, %s468
          %s470 = smul.addr %s469, 4
          %s471 = scalar_lea.vmem %s3, %s470
          %s472 = smul.u32 8, %s30
        $region68: #{tpu_custom_call.1} parent=51 // pred_fallthru
          _
      $region52: #{tpu_custom_call.1} parent=5 // pred_fallthru
        _
      %p473 = scmp.le.s32.totalorder 1, %s22
      %p474 = scmp.lt.s32.totalorder %s22, 5
      %p475 = pnand %p473, %p474
      %p476 = pneg %p475
      // Predicated region
      $region69: #{tpu_custom_call.1} parent=5 // pred_check
        _
      $region70: #{tpu_custom_call.1} parent=5 // pred_check_branch
        %478 = sbr.rel (%p475) target = $region72
      $region71: #{tpu_custom_call.1} parent=5 // pred_region
        %s479 = ssub.s32 %s22, 1
        %p480 = scmp.lt.s32.totalorder %s32, 3
        %s481 = scalar_select %p480, %s32, 3
        %p482 = scmp.lt.s32.totalorder %s33, 0
        %s483 = scalar_select %p482, %s33, 0
        %s484 = sadd.s32 %s483, %s481
        %s485 = smul.addr %s484, 8
        %s486 = scalar_lea.vmem %s0, %s485
        %p487 = pneg %p69
        %p488 = pneg %p66
        %p489 = scmp.lt.s32.totalorder %s32, 3
        %s490 = scalar_select %p489, %s32, 3
        %p491 = scmp.lt.s32.totalorder %s34, 0
        %s492 = scalar_select %p491, %s34, 0
        %s493 = sadd.s32 %s492, %s490
        %s494 = smul.addr %s493, 8
        %s495 = scalar_lea.vmem %s1, %s494
        %p496 = pneg %p97
        %p497 = pneg %p94
        %s498 = smul.u32 8, %s33
        %p499 = scmp.lt.s32.totalorder %s32, 3
        %s500 = scalar_select %p499, %s32, 3
        %p501 = scmp.lt.s32.totalorder %s34, 0
        %s502 = scalar_select %p501, %s34, 0
        %p503 = scmp.lt.s32.totalorder %s498, 7
        %s504 = scalar_select %p503, %s498, 7
        %s505 = smul.addr %s502, 8
        %s506 = sadd.s32 %s504, %s505
        %s507 = smul.addr %s500, 8
        %s508 = sadd.s32 %s506, %s507
        %s509 = smul.addr %s508, 4
        %s510 = scalar_lea.vmem %s2, %s509
        %p511 = pneg %p127
        %p512 = pneg %p124
        %s513 = smul.u32 8, %s33
        %p514 = scmp.lt.s32.totalorder %s32, 3
        %s515 = scalar_select %p514, %s32, 3
        %p516 = scmp.lt.s32.totalorder %s513, 7
        %s517 = scalar_select %p516, %s513, 7
        %p518 = scmp.lt.s32.totalorder %s34, 0
        %s519 = scalar_select %p518, %s34, 0
        %s520 = sadd.s32 %s519, %s517
        %s521 = smul.addr %s515, 8
        %s522 = sadd.s32 %s520, %s521
        %s523 = smul.addr %s522, 4
        %s524 = scalar_lea.vmem %s3, %s523
        %p525 = pneg %p157
        %p526 = pneg %p154
        %p527 = pneg %p178
        %p528 = pneg %p175
        %p529 = pneg %p199
        %p530 = pneg %p196
        %p531 = pneg %p220
        %p532 = pneg %p217
        %p533 = pneg %p241
        %p534 = pneg %p238
        %p535 = pneg %p262
        %p536 = pneg %p259
        %p537 = pneg %p283
        %p538 = pneg %p280
        %p539 = pneg %p304
        %p540 = pneg %p301
        %p541 = pneg %p325
        %p542 = pneg %p322
        %p543 = pneg %p346
        %p544 = pneg %p343
        %p545 = pneg %p374
        %p546 = pneg %p371
        %s547 = sand.u32 %s361, 1
        %s548 = scalar_lea.sflag [#allocation7], %s547
        %s549 = sand.u32 %s361, 1
        %s550 = smul.addr %s549, 8
        %s551 = scalar_lea.vmem [#allocation6], %s550
        %p552 = scmp.lt.s32.totalorder %s32, 3
        %s553 = scalar_select %p552, %s32, 3
        %p554 = scmp.lt.s32.totalorder %s33, 0
        %s555 = scalar_select %p554, %s33, 0
        %s556 = sadd.s32 %s555, %s553
        %s557 = smul.addr %s556, 8
        %s558 = scalar_lea.vmem %s0, %s557
        %p559 = scmp.lt.s32.totalorder %s32, 3
        %s560 = scalar_select %p559, %s32, 3
        %p561 = scmp.lt.s32.totalorder %s34, 0
        %s562 = scalar_select %p561, %s34, 0
        %s563 = sadd.s32 %s562, %s560
        %s564 = smul.addr %s563, 8
        %s565 = scalar_lea.vmem %s1, %s564
        %s566 = smul.u32 8, %s33
        %p567 = scmp.lt.s32.totalorder %s32, 3
        %s568 = scalar_select %p567, %s32, 3
        %p569 = scmp.lt.s32.totalorder %s34, 0
        %s570 = scalar_select %p569, %s34, 0
        %p571 = scmp.lt.s32.totalorder %s566, 7
        %s572 = scalar_select %p571, %s566, 7
        %s573 = smul.addr %s570, 8
        %s574 = sadd.s32 %s572, %s573
        %s575 = smul.addr %s568, 8
        %s576 = sadd.s32 %s574, %s575
        %s577 = smul.addr %s576, 4
        %s578 = scalar_lea.vmem %s2, %s577
        %s579 = smul.u32 8, %s33
        %s580 = smul.u32 8, %s33
        %p581 = scmp.lt.s32.totalorder %s32, 3
        %s582 = scalar_select %p581, %s32, 3
        %p583 = scmp.lt.s32.totalorder %s580, 7
        %s584 = scalar_select %p583, %s580, 7
        %p585 = scmp.lt.s32.totalorder %s34, 0
        %s586 = scalar_select %p585, %s34, 0
        %s587 = sadd.s32 %s586, %s584
        %s588 = smul.addr %s582, 8
        %s589 = sadd.s32 %s587, %s588
        %s590 = smul.addr %s589, 4
        %s591 = scalar_lea.vmem %s3, %s590
        %s592 = smul.u32 8, %s33
        %p594 = scmp.eq.s32.totalorder %s34, 0
        // Predicated region
        $region73: #{tpu_custom_call.1} parent=71 // pred_check
          %p595 = pneg %p594
        $region74: #{tpu_custom_call.1} parent=71 // pred_check_branch
          %597 = sbr.rel (%p595) target = $region76
        $region75: #{tpu_custom_call.1} parent=71 // pred_region
          %v598 = vld [vmem:[%s558] sm:$0xff]
          %v599 = vld [vmem:[%s4] sm:$0xff]
          %v600 = vld [vmem:[%s4 + $0x8] sm:$0xff]
          %v601 = vld [vmem:[%s4 + $0x10] sm:$0xff]
          %v602 = vld [vmem:[%s4 + $0x18] sm:$0xff]
          %vm603 = vcmask 261120
          %v605 = vsel %vm603, %v598, 0
          %607 = vmatprep.subr.mxu0 0.0
          %608 = vmatpush1.msra.mxu0 %v599
          %609 = vmatprep.subr.mxu0 0.0
          %610 = vmatpush1.msra.mxu0 %v600
          %611 = vmatprep.subr.mxu0 0.0
          %612 = vmatpush1.msra.mxu0 %v601
          %613 = vmatprep.subr.mxu0 0.0
          %614 = vmatpush1.msra.mxu0 %v602
          %615 = vmatprep.subr.mxu0 0.0
          %616 = vmatpush1.msra.mxu0 0.0
          %617 = vmatprep.subr.mxu0 0.0
          %618 = vmatpush1.msra.mxu0 0.0
          %619 = vmatprep.subr.mxu0 0.0
          %620 = vmatpush1.msra.mxu0 0.0
          %621 = vmatprep.subr.mxu0 0.0
          %622 = vmatpush1.msra.mxu0 0.0
          %623 = vmatprep.subr.mxu0 0.0
          %624 = vmatpush1.msra.mxu0 0.0
          %625 = vmatprep.subr.mxu0 0.0
          %626 = vmatpush1.msra.mxu0 0.0
          %627 = vmatprep.subr.mxu0 0.0
          %628 = vmatpush1.msra.mxu0 0.0
          %629 = vmatprep.subr.mxu0 0.0
          %630 = vmatpush1.msra.mxu0 0.0
          %631 = vmatprep.subr.mxu0 0.0
          %632 = vmatpush1.msra.mxu0 0.0
          %633 = vmatprep.subr.mxu0 0.0
          %634 = vmatpush1.msra.mxu0 0.0
          %635 = vmatprep.subr.mxu0 0.0
          %636 = vmatpush1.msra.mxu0 0.0
          %637 = vmatprep.subr.mxu0 0.0
          %638 = vmatpush1.msra.mxu0 0.0
          %639 = vmatprep.subr.mxu0 0.0
          %640 = vmatpush1.msra.mxu0 0.0
          %641 = vmatprep.subr.mxu0 0.0
          %642 = vmatpush1.msra.mxu0 0.0
          %643 = vmatprep.subr.mxu0 0.0
          %644 = vmatpush1.msra.mxu0 0.0
          %645 = vmatprep.subr.mxu0 0.0
          %646 = vmatpush1.msra.mxu0 0.0
          %647 = vmatprep.subr.mxu0 0.0
          %648 = vmatpush1.msra.mxu0 0.0
          %649 = vmatprep.subr.mxu0 0.0
          %650 = vmatpush1.msra.mxu0 0.0
          %651 = vmatprep.subr.mxu0 0.0
          %652 = vmatpush1.msra.mxu0 0.0
          %653 = vmatprep.subr.mxu0 0.0
          %654 = vmatpush1.msra.mxu0 0.0
          %655 = vmatprep.subr.mxu0 0.0
          %656 = vmatpush1.msra.mxu0 0.0
          %657 = vmatprep.subr.mxu0 0.0
          %658 = vmatpush1.msra.mxu0 0.0
          %659 = vmatprep.subr.mxu0 0.0
          %660 = vmatpush1.msra.mxu0 0.0
          %661 = vmatprep.subr.mxu0 0.0
          %662 = vmatpush1.msra.mxu0 0.0
          %663 = vmatprep.subr.mxu0 0.0
          %664 = vmatpush1.msra.mxu0 0.0
          %665 = vmatprep.subr.mxu0 0.0
          %666 = vmatpush1.msra.mxu0 0.0
          %667 = vmatprep.subr.mxu0 0.0
          %668 = vmatpush1.msra.mxu0 0.0
          %669 = vmatprep.subr.mxu0 0.0
          %670 = vmatpush1.msra.mxu0 0.0
          %671 = vmatprep.mubr.f32.mxu0 0.0
          %672 = vmatmul.mubr.f32.gmra.mrb[0].mxu0 %v605
          %v673 = vpop.f32.mrb[0].mxu0
          %v674 = vadd.f32 0.0, %v673
          %v675 = vpop.f32.mrb[0].mxu0
          %676 = vdwg.mxu0
          %vm677 = vcmask 785408
          %678 = vst.msk [vmem:[#allocation2] sm:$0xff] %vm677, %v674
          %679 = vst.msk [vmem:[#allocation3] sm:$0xff] %vm603, -1e+30
          %680 = vst.msk [vmem:[#allocation4] sm:$0xff] %vm603, 0.0
          %681 = vst.msk [vmem:[#allocation5] sm:$0xff] %vm603, 0.0
        $region76: #{tpu_custom_call.1} parent=71 // pred_fallthru
          _
        %v682 = vld [vmem:[%s578] sm:$0xf]
        %v683 = vld [vmem:[%s578 + $0x4] sm:$0xf]
        %v684 = vld [vmem:[%s578 + $0x8] sm:$0xf]
        %v685 = vld [vmem:[%s578 + $0xc] sm:$0xf]
        %v686 = vld [vmem:[%s578 + $0x10] sm:$0xf]
        %v687 = vld [vmem:[%s578 + $0x14] sm:$0xf]
        %v688 = vld [vmem:[%s578 + $0x18] sm:$0xf]
        %v689 = vld [vmem:[%s578 + $0x1c] sm:$0xf]
        %v690 = vld [vmem:[%s5] sm:$0xf]
        %v691 = vld [vmem:[%s5 + $0x4] sm:$0xf]
        %v692 = vld [vmem:[%s5 + $0x8] sm:$0xf]
        %v693 = vld [vmem:[%s5 + $0xc] sm:$0xf]
        %v702 = vunpack.c.l.b16 %v682
        %v703 = vunpack.c.l.b16 %v683
        %v704 = vunpack.c.l.b16 %v684
        %v705 = vunpack.c.l.b16 %v685
        %v706 = vunpack.c.l.b16 %v686
        %v707 = vunpack.c.l.b16 %v687
        %v708 = vunpack.c.l.b16 %v688
        %v709 = vunpack.c.l.b16 %v689
        %v710 = vpack.c.b16 %v703, %v702
        %v711 = vpack.c.b16 %v705, %v704
        %v712 = vpack.c.b16 %v707, %v706
        %v713 = vpack.c.b16 %v709, %v708
        %v718 = vunpack.c.l.b16 %v690
        %v719 = vunpack.c.l.b16 %v691
        %v720 = vunpack.c.l.b16 %v692
        %v721 = vunpack.c.l.b16 %v693
        %v722 = vpack.c.b16 %v719, %v718
        %v723 = vpack.c.b16 %v721, %v720
        %vm726 = vcmask 261120
        %v728 = vsel %vm726, %v710, 0
        %v731 = vsel %vm726, %v711, 0
        %v734 = vsel %vm726, %v712, 0
        %v737 = vsel %vm726, %v713, 0
        %739 = vmatprep.subr.bf16.mxu0 0
        %740 = vmatpush1.bf16.msra.mxu0 %v722
        %741 = vmatprep.subr.bf16.mxu0 0
        %742 = vmatpush1.bf16.msra.mxu0 %v723
        %743 = vmatprep.subr.bf16.mxu0 0
        %744 = vmatpush1.bf16.msra.mxu0 0
        %745 = vmatprep.subr.bf16.mxu0 0
        %746 = vmatpush1.bf16.msra.mxu0 0
        %747 = vmatprep.subr.bf16.mxu0 0
        %748 = vmatpush1.bf16.msra.mxu0 0
        %749 = vmatprep.subr.bf16.mxu0 0
        %750 = vmatpush1.bf16.msra.mxu0 0
        %751 = vmatprep.subr.bf16.mxu0 0
        %752 = vmatpush1.bf16.msra.mxu0 0
        %753 = vmatprep.subr.bf16.mxu0 0
        %754 = vmatpush1.bf16.msra.mxu0 0
        %755 = vmatprep.subr.bf16.mxu0 0
        %756 = vmatpush1.bf16.msra.mxu0 0
        %757 = vmatprep.subr.bf16.mxu0 0
        %758 = vmatpush1.bf16.msra.mxu0 0
        %759 = vmatprep.subr.bf16.mxu0 0
        %760 = vmatpush1.bf16.msra.mxu0 0
        %761 = vmatprep.subr.bf16.mxu0 0
        %762 = vmatpush1.bf16.msra.mxu0 0
        %763 = vmatprep.subr.bf16.mxu0 0
        %764 = vmatpush1.bf16.msra.mxu0 0
        %765 = vmatprep.subr.bf16.mxu0 0
        %766 = vmatpush1.bf16.msra.mxu0 0
        %767 = vmatprep.subr.bf16.mxu0 0
        %768 = vmatpush1.bf16.msra.mxu0 0
        %769 = vmatprep.subr.bf16.mxu0 0
        %770 = vmatpush1.bf16.msra.mxu0 0
        %771 = vmatprep.mubr.bf16.mxu0 0
        %772 = vmatmul.mubr.bf16.gmra.mrb[0].mxu0 %v728
        %v773 = vpop.f32.mrb[0].mxu0
        %v774 = vadd.f32 0.0, %v773
        %v775 = vpop.f32.mrb[0].mxu0
        %v776 = vpop.f32.mrb[0].mxu0
        %v777 = vadd.f32 0.0, %v776
        %v778 = vpop.f32.mrb[0].mxu0
        %779 = vmatprep.mubr.bf16.mxu0 0
        %780 = vmatmul.mubr.bf16.gmra.mrb[0].mxu0 %v731
        %v781 = vpop.f32.mrb[0].mxu0
        %v782 = vadd.f32 0.0, %v781
        %v783 = vpop.f32.mrb[0].mxu0
        %v784 = vpop.f32.mrb[0].mxu0
        %v785 = vadd.f32 0.0, %v784
        %v786 = vpop.f32.mrb[0].mxu0
        %787 = vmatprep.mubr.bf16.mxu0 0
        %788 = vmatmul.mubr.bf16.gmra.mrb[0].mxu0 %v734
        %v789 = vpop.f32.mrb[0].mxu0
        %v790 = vadd.f32 0.0, %v789
        %v791 = vpop.f32.mrb[0].mxu0
        %v792 = vpop.f32.mrb[0].mxu0
        %v793 = vadd.f32 0.0, %v792
        %v794 = vpop.f32.mrb[0].mxu0
        %795 = vmatprep.mubr.bf16.mxu0 0
        %796 = vmatmul.mubr.bf16.gmra.mrb[0].mxu0 %v737
        %v797 = vpop.f32.mrb[0].mxu0
        %v798 = vadd.f32 0.0, %v797
        %v799 = vpop.f32.mrb[0].mxu0
        %v800 = vpop.f32.mrb[0].mxu0
        %v801 = vadd.f32 0.0, %v800
        %v802 = vpop.f32.mrb[0].mxu0
        %803 = vdwg.mxu0
        %v804 = vld [vmem:[%s6] sm:$0xf]
        %v805 = vld [vmem:[%s6 + $0x4] sm:$0xf]
        %v806 = vld [vmem:[%s6 + $0x8] sm:$0xf]
        %v807 = vld [vmem:[%s6 + $0xc] sm:$0xf]
        %v812 = vunpack.c.l.b16 %v804
        %v813 = vunpack.c.l.b16 %v805
        %v814 = vunpack.c.l.b16 %v806
        %v815 = vunpack.c.l.b16 %v807
        %v816 = vpack.c.b16 %v813, %v812
        %v817 = vpack.c.b16 %v815, %v814
        %820 = vmatprep.subr.bf16.mxu0 0
        %821 = vmatpush1.bf16.msra.mxu0 %v816
        %822 = vmatprep.subr.bf16.mxu0 0
        %823 = vmatpush1.bf16.msra.mxu0 %v817
        %824 = vmatprep.subr.bf16.mxu0 0
        %825 = vmatpush1.bf16.msra.mxu0 0
        %826 = vmatprep.subr.bf16.mxu0 0
        %827 = vmatpush1.bf16.msra.mxu0 0
        %828 = vmatprep.subr.bf16.mxu0 0
        %829 = vmatpush1.bf16.msra.mxu0 0
        %830 = vmatprep.subr.bf16.mxu0 0
        %831 = vmatpush1.bf16.msra.mxu0 0
        %832 = vmatprep.subr.bf16.mxu0 0
        %833 = vmatpush1.bf16.msra.mxu0 0
        %834 = vmatprep.subr.bf16.mxu0 0
        %835 = vmatpush1.bf16.msra.mxu0 0
        %836 = vmatprep.subr.bf16.mxu0 0
        %837 = vmatpush1.bf16.msra.mxu0 0
        %838 = vmatprep.subr.bf16.mxu0 0
        %839 = vmatpush1.bf16.msra.mxu0 0
        %840 = vmatprep.subr.bf16.mxu0 0
        %841 = vmatpush1.bf16.msra.mxu0 0
        %842 = vmatprep.subr.bf16.mxu0 0
        %843 = vmatpush1.bf16.msra.mxu0 0
        %844 = vmatprep.subr.bf16.mxu0 0
        %845 = vmatpush1.bf16.msra.mxu0 0
        %846 = vmatprep.subr.bf16.mxu0 0
        %847 = vmatpush1.bf16.msra.mxu0 0
        %848 = vmatprep.subr.bf16.mxu0 0
        %849 = vmatpush1.bf16.msra.mxu0 0
        %850 = vmatprep.subr.bf16.mxu0 0
        %851 = vmatpush1.bf16.msra.mxu0 0
        %852 = vmatprep.mubr.bf16.mxu0 0
        %853 = vmatmul.mubr.bf16.gmra.mrb[0].mxu0 %v728
        %v854 = vpop.f32.mrb[0].mxu0
        %v855 = vadd.f32 0.0, %v854
        %v856 = vpop.f32.mrb[0].mxu0
        %v857 = vpop.f32.mrb[0].mxu0
        %v858 = vadd.f32 0.0, %v857
        %v859 = vpop.f32.mrb[0].mxu0
        %860 = vmatprep.mubr.bf16.mxu0 0
        %861 = vmatmul.mubr.bf16.gmra.mrb[0].mxu0 %v731
        %v862 = vpop.f32.mrb[0].mxu0
        %v863 = vadd.f32 0.0, %v862
        %v864 = vpop.f32.mrb[0].mxu0
        %v865 = vpop.f32.mrb[0].mxu0
        %v866 = vadd.f32 0.0, %v865
        %v867 = vpop.f32.mrb[0].mxu0
        %868 = vmatprep.mubr.bf16.mxu0 0
        %869 = vmatmul.mubr.bf16.gmra.mrb[0].mxu0 %v734
        %v870 = vpop.f32.mrb[0].mxu0
        %v871 = vadd.f32 0.0, %v870
        %v872 = vpop.f32.mrb[0].mxu0
        %v873 = vpop.f32.mrb[0].mxu0
        %v874 = vadd.f32 0.0, %v873
        %v875 = vpop.f32.mrb[0].mxu0
        %876 = vmatprep.mubr.bf16.mxu0 0
        %877 = vmatmul.mubr.bf16.gmra.mrb[0].mxu0 %v737
        %v878 = vpop.f32.mrb[0].mxu0
        %v879 = vadd.f32 0.0, %v878
        %v880 = vpop.f32.mrb[0].mxu0
        %v881 = vpop.f32.mrb[0].mxu0
        %v882 = vadd.f32 0.0, %v881
        %v883 = vpop.f32.mrb[0].mxu0
        %884 = vdwg.mxu0
        %v885 = vld [vmem:[#allocation2] sm:$0xff]
        %v886 = vld [vmem:[%s565] sm:$0xff]
        %v888 = vcombine.high %v885, %v885
        %v890 = vunpack.c.l.s4 1966171168
        %v891 = vunpack.c.0.s8 %v890
        %v892 = vlaneseq
        %v893 = vshrl.u32 %v892, 7
        %v894 = vsub.s32 %v891, %v893
        %v895 = vrot.slane %v885, %v894
        %v897 = vunpack.c.l.s4 1966171168
        %v898 = vunpack.c.0.s8 %v897
        %v899 = vlaneseq
        %v900 = vshrl.u32 %v899, 7
        %v901 = vsub.s32 %v898, %v900
        %v902 = vrot.slane %v888, %v901
        %v903 = vcombine.high %v895, %v895
        %v904 = vcombine.high %v902, %v902
        %v906 = vunpack.c.l.s4 1966171168
        %v907 = vunpack.c.0.s8 %v906
        %v908 = vlaneseq
        %v909 = vshrl.u32 %v908, 7
        %v910 = vsub.s32 %v907, %v909
        %v911 = vrot.slane %v895, %v910
        %v913 = vunpack.c.l.s4 1966171168
        %v914 = vunpack.c.0.s8 %v913
        %v915 = vlaneseq
        %v916 = vshrl.u32 %v915, 7
        %v917 = vsub.s32 %v914, %v916
        %v918 = vrot.slane %v902, %v917
        %v920 = vunpack.c.l.s4 1966171168
        %v921 = vunpack.c.0.s8 %v920
        %v922 = vlaneseq
        %v923 = vshrl.u32 %v922, 7
        %v924 = vsub.s32 %v921, %v923
        %v925 = vrot.slane %v903, %v924
        %v927 = vunpack.c.l.s4 1966171168
        %v928 = vunpack.c.0.s8 %v927
        %v929 = vlaneseq
        %v930 = vshrl.u32 %v929, 7
        %v931 = vsub.s32 %v928, %v930
        %v932 = vrot.slane %v904, %v931
        %v933 = vcombine.high %v911, %v911
        %v934 = vcombine.high %v918, %v918
        %v935 = vcombine.high %v925, %v925
        %v936 = vcombine.high %v932, %v932
        %v937 = vlaneseq
        %v938 = vshrl.u32 %v937, 7
        %v939 = vsub.s32 0, %v938
        %v940 = vrot.slane %v911, %v939
        %v941 = vlaneseq
        %v942 = vshrl.u32 %v941, 7
        %v943 = vsub.s32 0, %v942
        %v944 = vrot.slane %v925, %v943
        %v945 = vlaneseq
        %v946 = vshrl.u32 %v945, 7
        %v947 = vsub.s32 0, %v946
        %v948 = vrot.slane %v933, %v947
        %v949 = vlaneseq
        %v950 = vshrl.u32 %v949, 7
        %v951 = vsub.s32 0, %v950
        %v952 = vrot.slane %v935, %v951
        %v953 = vlaneseq
        %v954 = vshrl.u32 %v953, 7
        %v955 = vsub.s32 0, %v954
        %v956 = vrot.slane %v918, %v955
        %v957 = vlaneseq
        %v958 = vshrl.u32 %v957, 7
        %v959 = vsub.s32 0, %v958
        %v960 = vrot.slane %v932, %v959
        %v961 = vlaneseq
        %v962 = vshrl.u32 %v961, 7
        %v963 = vsub.s32 0, %v962
        %v964 = vrot.slane %v934, %v963
        %v965 = vlaneseq
        %v966 = vshrl.u32 %v965, 7
        %v967 = vsub.s32 0, %v966
        %v968 = vrot.slane %v936, %v967
        %v977 = vadd.f32 %v940, %v774
        %v978 = vadd.f32 %v944, %v777
        %v979 = vadd.f32 %v948, %v782
        %v980 = vadd.f32 %v952, %v785
        %v981 = vadd.f32 %v956, %v790
        %v982 = vadd.f32 %v960, %v793
        %v983 = vadd.f32 %v964, %v798
        %v984 = vadd.f32 %v968, %v801
        %v985 = vmul.f32 %v886, %v977
        %v986 = vmul.f32 %v886, %v978
        %v987 = vmul.f32 %v886, %v979
        %v988 = vmul.f32 %v886, %v980
        %v989 = vmul.f32 %v886, %v981
        %v990 = vmul.f32 %v886, %v982
        %v991 = vmul.f32 %v886, %v983
        %v992 = vmul.f32 %v886, %v984
        %v993 = vld [vmem:[%s591] sm:$0xf]
        %v994 = vld [vmem:[%s591 + $0x4] sm:$0xf]
        %v995 = vld [vmem:[%s591 + $0x8] sm:$0xf]
        %v996 = vld [vmem:[%s591 + $0xc] sm:$0xf]
        %v997 = vld [vmem:[%s591 + $0x10] sm:$0xf]
        %v998 = vld [vmem:[%s591 + $0x14] sm:$0xf]
        %v999 = vld [vmem:[%s591 + $0x18] sm:$0xf]
        %v1000 = vld [vmem:[%s591 + $0x1c] sm:$0xf]
        %v1001 = vunpack.c.l.bf16 %v993
        %v1002 = vunpack.c.l.bf16 %v994
        %v1003 = vunpack.c.l.bf16 %v995
        %v1004 = vunpack.c.l.bf16 %v996
        %v1005 = vunpack.c.l.bf16 %v997
        %v1006 = vunpack.c.l.bf16 %v998
        %v1007 = vunpack.c.l.bf16 %v999
        %v1008 = vunpack.c.l.bf16 %v1000
        %1010 = vset.pattern.permute.xlu0 0
        %1011 = vperm.xlu0 %1010, %v1001
        %v1012 = vpop.permute.xlu0 %1011
        %1015 = vset.pattern.permute.xlu0 0
        %1016 = vperm.xlu0 %1015, %v1002
        %v1017 = vpop.permute.xlu0 %1016
        %1020 = vset.pattern.permute.xlu0 0
        %1021 = vperm.xlu0 %1020, %v1003
        %v1022 = vpop.permute.xlu0 %1021
        %1025 = vset.pattern.permute.xlu0 0
        %1026 = vperm.xlu0 %1025, %v1004
        %v1027 = vpop.permute.xlu0 %1026
        %1030 = vset.pattern.permute.xlu0 0
        %1031 = vperm.xlu0 %1030, %v1005
        %v1032 = vpop.permute.xlu0 %1031
        %1035 = vset.pattern.permute.xlu0 0
        %1036 = vperm.xlu0 %1035, %v1006
        %v1037 = vpop.permute.xlu0 %1036
        %1040 = vset.pattern.permute.xlu0 0
        %1041 = vperm.xlu0 %1040, %v1007
        %v1042 = vpop.permute.xlu0 %1041
        %1045 = vset.pattern.permute.xlu0 0
        %1046 = vperm.xlu0 %1045, %v1008
        %v1047 = vpop.permute.xlu0 %1046
        %v1049 = vadd.f32 %v985, %v1012
        %v1050 = vadd.f32 %v986, %v1017
        %v1051 = vadd.f32 %v987, %v1022
        %v1052 = vadd.f32 %v988, %v1027
        %v1053 = vadd.f32 %v989, %v1032
        %v1054 = vadd.f32 %v990, %v1037
        %v1055 = vadd.f32 %v991, %v1042
        %v1056 = vadd.f32 %v992, %v1047
        %v1057 = vld [vmem:[#allocation3] sm:$0xff]
        %v1058 = vsel %vm726, %v1049, -inf
        %v1059 = vrot.slane %v1058, 4
        %v1060 = vmax.f32 %v1058, %v1059
        %v1061 = vrot.slane %v1060, 2
        %v1062 = vmax.f32 %v1060, %v1061
        %v1063 = vrot.slane %v1062, 1
        %v1064 = vmax.f32 %v1062, %v1063
        %v1065 = vsel %vm726, %v1050, -inf
        %v1066 = vrot.slane %v1065, 4
        %v1067 = vmax.f32 %v1065, %v1066
        %v1068 = vrot.slane %v1067, 2
        %v1069 = vmax.f32 %v1067, %v1068
        %v1070 = vrot.slane %v1069, 1
        %v1071 = vmax.f32 %v1069, %v1070
        %v1072 = vsel %vm726, %v1051, -inf
        %v1073 = vrot.slane %v1072, 4
        %v1074 = vmax.f32 %v1072, %v1073
        %v1075 = vrot.slane %v1074, 2
        %v1076 = vmax.f32 %v1074, %v1075
        %v1077 = vrot.slane %v1076, 1
        %v1078 = vmax.f32 %v1076, %v1077
        %v1079 = vsel %vm726, %v1052, -inf
        %v1080 = vrot.slane %v1079, 4
        %v1081 = vmax.f32 %v1079, %v1080
        %v1082 = vrot.slane %v1081, 2
        %v1083 = vmax.f32 %v1081, %v1082
        %v1084 = vrot.slane %v1083, 1
        %v1085 = vmax.f32 %v1083, %v1084
        %v1086 = vsel %vm726, %v1053, -inf
        %v1087 = vrot.slane %v1086, 4
        %v1088 = vmax.f32 %v1086, %v1087
        %v1089 = vrot.slane %v1088, 2
        %v1090 = vmax.f32 %v1088, %v1089
        %v1091 = vrot.slane %v1090, 1
        %v1092 = vmax.f32 %v1090, %v1091
        %v1093 = vsel %vm726, %v1054, -inf
        %v1094 = vrot.slane %v1093, 4
        %v1095 = vmax.f32 %v1093, %v1094
        %v1096 = vrot.slane %v1095, 2
        %v1097 = vmax.f32 %v1095, %v1096
        %v1098 = vrot.slane %v1097, 1
        %v1099 = vmax.f32 %v1097, %v1098
        %v1100 = vsel %vm726, %v1055, -inf
        %v1101 = vrot.slane %v1100, 4
        %v1102 = vmax.f32 %v1100, %v1101
        %v1103 = vrot.slane %v1102, 2
        %v1104 = vmax.f32 %v1102, %v1103
        %v1105 = vrot.slane %v1104, 1
        %v1106 = vmax.f32 %v1104, %v1105
        %v1107 = vsel %vm726, %v1056, -inf
        %v1108 = vrot.slane %v1107, 4
        %v1109 = vmax.f32 %v1107, %v1108
        %v1110 = vrot.slane %v1109, 2
        %v1111 = vmax.f32 %v1109, %v1110
        %v1112 = vrot.slane %v1111, 1
        %v1113 = vmax.f32 %v1111, %v1112
        %vm1122 = vcmask 1041409
        %v1123 = vsel %vm1122, %v1071, %v1064
        %vm1124 = vcmask 1042434
        %v1125 = vsel %vm1124, %v1078, %v1123
        %vm1126 = vcmask 1043459
        %v1127 = vsel %vm1126, %v1085, %v1125
        %vm1128 = vcmask 1044484
        %v1129 = vsel %vm1128, %v1092, %v1127
        %vm1130 = vcmask 1045509
        %v1131 = vsel %vm1130, %v1099, %v1129
        %vm1132 = vcmask 1046534
        %v1133 = vsel %vm1132, %v1106, %v1131
        %vm1134 = vcmask 1047559
        %v1135 = vsel %vm1134, %v1113, %v1133
        %v1137 = vmax.f32 %v1057, %v1135
        %v1138 = vsub.f32 %v1057, %v1137
        %v1139 = vmul.f32 %v1138, 1.442695
        %v1140 = vpow.pop %v1139
        %v1142 = vcombine.high %v1137, %v1137
        %v1144 = vunpack.c.l.s4 1966171168
        %v1145 = vunpack.c.0.s8 %v1144
        %v1146 = vlaneseq
        %v1147 = vshrl.u32 %v1146, 7
        %v1148 = vsub.s32 %v1145, %v1147
        %v1149 = vrot.slane %v1137, %v1148
        %v1151 = vunpack.c.l.s4 1966171168
        %v1152 = vunpack.c.0.s8 %v1151
        %v1153 = vlaneseq
        %v1154 = vshrl.u32 %v1153, 7
        %v1155 = vsub.s32 %v1152, %v1154
        %v1156 = vrot.slane %v1142, %v1155
        %v1157 = vcombine.high %v1149, %v1149
        %v1158 = vcombine.high %v1156, %v1156
        %v1160 = vunpack.c.l.s4 1966171168
        %v1161 = vunpack.c.0.s8 %v1160
        %v1162 = vlaneseq
        %v1163 = vshrl.u32 %v1162, 7
        %v1164 = vsub.s32 %v1161, %v1163
        %v1165 = vrot.slane %v1149, %v1164
        %v1167 = vunpack.c.l.s4 1966171168
        %v1168 = vunpack.c.0.s8 %v1167
        %v1169 = vlaneseq
        %v1170 = vshrl.u32 %v1169, 7
        %v1171 = vsub.s32 %v1168, %v1170
        %v1172 = vrot.slane %v1156, %v1171
        %v1174 = vunpack.c.l.s4 1966171168
        %v1175 = vunpack.c.0.s8 %v1174
        %v1176 = vlaneseq
        %v1177 = vshrl.u32 %v1176, 7
        %v1178 = vsub.s32 %v1175, %v1177
        %v1179 = vrot.slane %v1157, %v1178
        %v1181 = vunpack.c.l.s4 1966171168
        %v1182 = vunpack.c.0.s8 %v1181
        %v1183 = vlaneseq
        %v1184 = vshrl.u32 %v1183, 7
        %v1185 = vsub.s32 %v1182, %v1184
        %v1186 = vrot.slane %v1158, %v1185
        %v1187 = vcombine.high %v1165, %v1165
        %v1188 = vcombine.high %v1172, %v1172
        %v1189 = vcombine.high %v1179, %v1179
        %v1190 = vcombine.high %v1186, %v1186
        %v1191 = vlaneseq
        %v1192 = vshrl.u32 %v1191, 7
        %v1193 = vsub.s32 0, %v1192
        %v1194 = vrot.slane %v1165, %v1193
        %v1195 = vlaneseq
        %v1196 = vshrl.u32 %v1195, 7
        %v1197 = vsub.s32 0, %v1196
        %v1198 = vrot.slane %v1179, %v1197
        %v1199 = vlaneseq
        %v1200 = vshrl.u32 %v1199, 7
        %v1201 = vsub.s32 0, %v1200
        %v1202 = vrot.slane %v1187, %v1201
        %v1203 = vlaneseq
        %v1204 = vshrl.u32 %v1203, 7
        %v1205 = vsub.s32 0, %v1204
        %v1206 = vrot.slane %v1189, %v1205
        %v1207 = vlaneseq
        %v1208 = vshrl.u32 %v1207, 7
        %v1209 = vsub.s32 0, %v1208
        %v1210 = vrot.slane %v1172, %v1209
        %v1211 = vlaneseq
        %v1212 = vshrl.u32 %v1211, 7
        %v1213 = vsub.s32 0, %v1212
        %v1214 = vrot.slane %v1186, %v1213
        %v1215 = vlaneseq
        %v1216 = vshrl.u32 %v1215, 7
        %v1217 = vsub.s32 0, %v1216
        %v1218 = vrot.slane %v1188, %v1217
        %v1219 = vlaneseq
        %v1220 = vshrl.u32 %v1219, 7
        %v1221 = vsub.s32 0, %v1220
        %v1222 = vrot.slane %v1190, %v1221
        %v1231 = vsub.f32 %v1049, %v1194
        %v1232 = vsub.f32 %v1050, %v1198
        %v1233 = vsub.f32 %v1051, %v1202
        %v1234 = vsub.f32 %v1052, %v1206
        %v1235 = vsub.f32 %v1053, %v1210
        %v1236 = vsub.f32 %v1054, %v1214
        %v1237 = vsub.f32 %v1055, %v1218
        %v1238 = vsub.f32 %v1056, %v1222
        %v1239 = vmul.f32 %v1231, 1.442695
        %v1240 = vpow.pop %v1239
        %v1241 = vmul.f32 %v1232, 1.442695
        %v1242 = vpow.pop %v1241
        %v1243 = vmul.f32 %v1233, 1.442695
        %v1244 = vpow.pop %v1243
        %v1245 = vmul.f32 %v1234, 1.442695
        %v1246 = vpow.pop %v1245
        %v1247 = vmul.f32 %v1235, 1.442695
        %v1248 = vpow.pop %v1247
        %v1249 = vmul.f32 %v1236, 1.442695
        %v1250 = vpow.pop %v1249
        %v1251 = vmul.f32 %v1237, 1.442695
        %v1252 = vpow.pop %v1251
        %v1253 = vmul.f32 %v1238, 1.442695
        %v1254 = vpow.pop %v1253
        %v1255 = vld [vmem:[#allocation4] sm:$0xff]
        %v1256 = vmul.f32 %v1140, %v1255
        %v1257 = vsel %vm726, %v1240, 0.0
        %v1258 = vrot.slane %v1257, 4
        %v1259 = vadd.f32 %v1257, %v1258
        %v1260 = vrot.slane %v1259, 2
        %v1261 = vadd.f32 %v1259, %v1260
        %v1262 = vrot.slane %v1261, 1
        %v1263 = vadd.f32 %v1261, %v1262
        %v1264 = vsel %vm726, %v1242, 0.0
        %v1265 = vrot.slane %v1264, 4
        %v1266 = vadd.f32 %v1264, %v1265
        %v1267 = vrot.slane %v1266, 2
        %v1268 = vadd.f32 %v1266, %v1267
        %v1269 = vrot.slane %v1268, 1
        %v1270 = vadd.f32 %v1268, %v1269
        %v1271 = vsel %vm726, %v1244, 0.0
        %v1272 = vrot.slane %v1271, 4
        %v1273 = vadd.f32 %v1271, %v1272
        %v1274 = vrot.slane %v1273, 2
        %v1275 = vadd.f32 %v1273, %v1274
        %v1276 = vrot.slane %v1275, 1
        %v1277 = vadd.f32 %v1275, %v1276
        %v1278 = vsel %vm726, %v1246, 0.0
        %v1279 = vrot.slane %v1278, 4
        %v1280 = vadd.f32 %v1278, %v1279
        %v1281 = vrot.slane %v1280, 2
        %v1282 = vadd.f32 %v1280, %v1281
        %v1283 = vrot.slane %v1282, 1
        %v1284 = vadd.f32 %v1282, %v1283
        %v1285 = vsel %vm726, %v1248, 0.0
        %v1286 = vrot.slane %v1285, 4
        %v1287 = vadd.f32 %v1285, %v1286
        %v1288 = vrot.slane %v1287, 2
        %v1289 = vadd.f32 %v1287, %v1288
        %v1290 = vrot.slane %v1289, 1
        %v1291 = vadd.f32 %v1289, %v1290
        %v1292 = vsel %vm726, %v1250, 0.0
        %v1293 = vrot.slane %v1292, 4
        %v1294 = vadd.f32 %v1292, %v1293
        %v1295 = vrot.slane %v1294, 2
        %v1296 = vadd.f32 %v1294, %v1295
        %v1297 = vrot.slane %v1296, 1
        %v1298 = vadd.f32 %v1296, %v1297
        %v1299 = vsel %vm726, %v1252, 0.0
        %v1300 = vrot.slane %v1299, 4
        %v1301 = vadd.f32 %v1299, %v1300
        %v1302 = vrot.slane %v1301, 2
        %v1303 = vadd.f32 %v1301, %v1302
        %v1304 = vrot.slane %v1303, 1
        %v1305 = vadd.f32 %v1303, %v1304
        %v1306 = vsel %vm726, %v1254, 0.0
        %v1307 = vrot.slane %v1306, 4
        %v1308 = vadd.f32 %v1306, %v1307
        %v1309 = vrot.slane %v1308, 2
        %v1310 = vadd.f32 %v1308, %v1309
        %v1311 = vrot.slane %v1310, 1
        %v1312 = vadd.f32 %v1310, %v1311
        %v1321 = vsel %vm1122, %v1270, %v1263
        %v1322 = vsel %vm1124, %v1277, %v1321
        %v1323 = vsel %vm1126, %v1284, %v1322
        %v1324 = vsel %vm1128, %v1291, %v1323
        %v1325 = vsel %vm1130, %v1298, %v1324
        %v1326 = vsel %vm1132, %v1305, %v1325
        %v1327 = vsel %vm1134, %v1312, %v1326
        %v1329 = vadd.f32 %v1256, %v1327
        %1330 = vst.msk [vmem:[#allocation4] sm:$0xff] %vm726, %v1329
        %v1331 = vld [vmem:[#allocation5] sm:$0xff]
        %v1332 = vmul.f32 %v1140, %v1331
        %v1333 = vmul.f32 %v1240, %v855
        %v1334 = vmul.f32 %v1242, %v858
        %v1335 = vmul.f32 %v1244, %v863
        %v1336 = vmul.f32 %v1246, %v866
        %v1337 = vmul.f32 %v1248, %v871
        %v1338 = vmul.f32 %v1250, %v874
        %v1339 = vmul.f32 %v1252, %v879
        %v1340 = vmul.f32 %v1254, %v882
        %v1341 = vsel %vm726, %v1333, 0.0
        %v1342 = vrot.slane %v1341, 4
        %v1343 = vadd.f32 %v1341, %v1342
        %v1344 = vrot.slane %v1343, 2
        %v1345 = vadd.f32 %v1343, %v1344
        %v1346 = vrot.slane %v1345, 1
        %v1347 = vadd.f32 %v1345, %v1346
        %v1348 = vsel %vm726, %v1334, 0.0
        %v1349 = vrot.slane %v1348, 4
        %v1350 = vadd.f32 %v1348, %v1349
        %v1351 = vrot.slane %v1350, 2
        %v1352 = vadd.f32 %v1350, %v1351
        %v1353 = vrot.slane %v1352, 1
        %v1354 = vadd.f32 %v1352, %v1353
        %v1355 = vsel %vm726, %v1335, 0.0
        %v1356 = vrot.slane %v1355, 4
        %v1357 = vadd.f32 %v1355, %v1356
        %v1358 = vrot.slane %v1357, 2
        %v1359 = vadd.f32 %v1357, %v1358
        %v1360 = vrot.slane %v1359, 1
        %v1361 = vadd.f32 %v1359, %v1360
        %v1362 = vsel %vm726, %v1336, 0.0
        %v1363 = vrot.slane %v1362, 4
        %v1364 = vadd.f32 %v1362, %v1363
        %v1365 = vrot.slane %v1364, 2
        %v1366 = vadd.f32 %v1364, %v1365
        %v1367 = vrot.slane %v1366, 1
        %v1368 = vadd.f32 %v1366, %v1367
        %v1369 = vsel %vm726, %v1337, 0.0
        %v1370 = vrot.slane %v1369, 4
        %v1371 = vadd.f32 %v1369, %v1370
        %v1372 = vrot.slane %v1371, 2
        %v1373 = vadd.f32 %v1371, %v1372
        %v1374 = vrot.slane %v1373, 1
        %v1375 = vadd.f32 %v1373, %v1374
        %v1376 = vsel %vm726, %v1338, 0.0
        %v1377 = vrot.slane %v1376, 4
        %v1378 = vadd.f32 %v1376, %v1377
        %v1379 = vrot.slane %v1378, 2
        %v1380 = vadd.f32 %v1378, %v1379
        %v1381 = vrot.slane %v1380, 1
        %v1382 = vadd.f32 %v1380, %v1381
        %v1383 = vsel %vm726, %v1339, 0.0
        %v1384 = vrot.slane %v1383, 4
        %v1385 = vadd.f32 %v1383, %v1384
        %v1386 = vrot.slane %v1385, 2
        %v1387 = vadd.f32 %v1385, %v1386
        %v1388 = vrot.slane %v1387, 1
        %v1389 = vadd.f32 %v1387, %v1388
        %v1390 = vsel %vm726, %v1340, 0.0
        %v1391 = vrot.slane %v1390, 4
        %v1392 = vadd.f32 %v1390, %v1391
        %v1393 = vrot.slane %v1392, 2
        %v1394 = vadd.f32 %v1392, %v1393
        %v1395 = vrot.slane %v1394, 1
        %v1396 = vadd.f32 %v1394, %v1395
        %v1405 = vsel %vm1122, %v1354, %v1347
        %v1406 = vsel %vm1124, %v1361, %v1405
        %v1407 = vsel %vm1126, %v1368, %v1406
        %v1408 = vsel %vm1128, %v1375, %v1407
        %v1409 = vsel %vm1130, %v1382, %v1408
        %v1410 = vsel %vm1132, %v1389, %v1409
        %v1411 = vsel %vm1134, %v1396, %v1410
        %v1413 = vadd.f32 %v1332, %v1411
        %1414 = vst.msk [vmem:[#allocation5] sm:$0xff] %vm726, %v1413
        %1415 = vst.msk [vmem:[#allocation3] sm:$0xff] %vm726, %v1137
        // Predicated region
        $region77: #{tpu_custom_call.1} parent=71 // pred_check
          %p1416 = pneg %p594
        $region78: #{tpu_custom_call.1} parent=71 // pred_check_branch
          %1418 = sbr.rel (%p1416) target = $region80
        $region79: #{tpu_custom_call.1} parent=71 // pred_region
          %v1419 = vld [vmem:[#allocation2] sm:$0xff]
          %1421 = vrot.lane.b32.xlu0 %v1419, 32
          %v1422 = vpop.permute.xlu0 %1421
          %v1424 = vadd.f32 %v1419, %v1422
          %v1425 = vld [vmem:[#allocation5] sm:$0xff]
          %v1426 = vld [vmem:[#allocation4] sm:$0xff]
          %v1427 = vrcp.pop %v1426
          %v1428 = vmul.f32 %v1425, %v1427
          %1430 = vrot.lane.b32.xlu0 %v1428, 64
          %v1431 = vpop.permute.xlu0 %1430
          %v1433 = vadd.f32 %v1424, %v1431
          %v1434 = vld [vmem:[%s7] sm:$0x1]
          %v1435 = vld [vmem:[%s8] sm:$0x1]
          %1437 = vrot.lane.b32.xlu0 %v1433, 64
          %v1438 = vpop.permute.xlu0 %1437
          %v1440 = vsel %vm726, %v1438, 0.0
          %1441 = vadd.xlane.f32.xlu0 %v1440
          %v1442 = vpop.xlane.xlu0 %1441
          %v1443 = vrcp.pop 32.0
          %v1444 = vmul.f32 %v1442, %v1443
          %v1445 = vsub.f32 %v1433, %v1444
          %v1446 = vmul.f32 %v1445, %v1445
          %1448 = vrot.lane.b32.xlu0 %v1446, 64
          %v1449 = vpop.permute.xlu0 %1448
          %v1451 = vsel %vm726, %v1449, 0.0
          %1452 = vadd.xlane.f32.xlu0 %v1451
          %v1453 = vpop.xlane.xlu0 %1452
          %v1454 = vmul.f32 %v1453, %v1443
          %v1455 = vadd.f32 %v1454, 1e-05
          %v1456 = vrsqrt.pop %v1455
          %v1457 = vmul.f32 %v1445, %v1456
          %v1459 = vlaneseq
          %v1460 = vshrl.u32 %v1459, 7
          %v1461 = vsub.s32 0, %v1460
          %v1462 = vrot.slane %v1434, %v1461
          %1463 = vrot.lane.b32.xlu0 %v1462, 64
          %v1464 = vpop.permute.xlu0 %1463
          %v1466 = vmul.f32 %v1457, %v1464
          %v1468 = vlaneseq
          %v1469 = vshrl.u32 %v1468, 7
          %v1470 = vsub.s32 0, %v1469
          %v1471 = vrot.slane %v1435, %v1470
          %1472 = vrot.lane.b32.xlu0 %v1471, 64
          %v1473 = vpop.permute.xlu0 %1472
          %v1475 = vadd.f32 %v1466, %v1473
          %v1476 = vld [vmem:[%s9] sm:$0xff]
          %v1477 = vld [vmem:[%s9 + $0x8] sm:$0xff]
          %v1478 = vld [vmem:[%s9 + $0x10] sm:$0xff]
          %v1479 = vld [vmem:[%s9 + $0x18] sm:$0xff]
          %v1480 = vld [vmem:[%s10] sm:$0x1]
          %v1482 = vlaneseq
          %v1483 = vshrl.u32 %v1482, 7
          %v1484 = vsub.s32 0, %v1483
          %v1485 = vrot.slane %v1480, %v1484
          %1488 = vrot.lane.b32.xlu0 %v1475, 64
          %v1489 = vpop.permute.xlu0 %1488
          %v1490 = vsel %vm726, %v1489, 0
          %1492 = vmatprep.subr.mxu0 0.0
          %1493 = vmatpush1.msra.mxu0 %v1476
          %1494 = vmatprep.subr.mxu0 0.0
          %1495 = vmatpush1.msra.mxu0 %v1477
          %1496 = vmatprep.subr.mxu0 0.0
          %1497 = vmatpush1.msra.mxu0 %v1478
          %1498 = vmatprep.subr.mxu0 0.0
          %1499 = vmatpush1.msra.mxu0 %v1479
          %1500 = vmatprep.subr.mxu0 0.0
          %1501 = vmatpush1.msra.mxu0 0.0
          %1502 = vmatprep.subr.mxu0 0.0
          %1503 = vmatpush1.msra.mxu0 0.0
          %1504 = vmatprep.subr.mxu0 0.0
          %1505 = vmatpush1.msra.mxu0 0.0
          %1506 = vmatprep.subr.mxu0 0.0
          %1507 = vmatpush1.msra.mxu0 0.0
          %1508 = vmatprep.subr.mxu0 0.0
          %1509 = vmatpush1.msra.mxu0 0.0
          %1510 = vmatprep.subr.mxu0 0.0
          %1511 = vmatpush1.msra.mxu0 0.0
          %1512 = vmatprep.subr.mxu0 0.0
          %1513 = vmatpush1.msra.mxu0 0.0
          %1514 = vmatprep.subr.mxu0 0.0
          %1515 = vmatpush1.msra.mxu0 0.0
          %1516 = vmatprep.subr.mxu0 0.0
          %1517 = vmatpush1.msra.mxu0 0.0
          %1518 = vmatprep.subr.mxu0 0.0
          %1519 = vmatpush1.msra.mxu0 0.0
          %1520 = vmatprep.subr.mxu0 0.0
          %1521 = vmatpush1.msra.mxu0 0.0
          %1522 = vmatprep.subr.mxu0 0.0
          %1523 = vmatpush1.msra.mxu0 0.0
          %1524 = vmatprep.subr.mxu0 0.0
          %1525 = vmatpush1.msra.mxu0 0.0
          %1526 = vmatprep.subr.mxu0 0.0
          %1527 = vmatpush1.msra.mxu0 0.0
          %1528 = vmatprep.subr.mxu0 0.0
          %1529 = vmatpush1.msra.mxu0 0.0
          %1530 = vmatprep.subr.mxu0 0.0
          %1531 = vmatpush1.msra.mxu0 0.0
          %1532 = vmatprep.subr.mxu0 0.0
          %1533 = vmatpush1.msra.mxu0 0.0
          %1534 = vmatprep.subr.mxu0 0.0
          %1535 = vmatpush1.msra.mxu0 0.0
          %1536 = vmatprep.subr.mxu0 0.0
          %1537 = vmatpush1.msra.mxu0 0.0
          %1538 = vmatprep.subr.mxu0 0.0
          %1539 = vmatpush1.msra.mxu0 0.0
          %1540 = vmatprep.subr.mxu0 0.0
          %1541 = vmatpush1.msra.mxu0 0.0
          %1542 = vmatprep.subr.mxu0 0.0
          %1543 = vmatpush1.msra.mxu0 0.0
          %1544 = vmatprep.subr.mxu0 0.0
          %1545 = vmatpush1.msra.mxu0 0.0
          %1546 = vmatprep.subr.mxu0 0.0
          %1547 = vmatpush1.msra.mxu0 0.0
          %1548 = vmatprep.subr.mxu0 0.0
          %1549 = vmatpush1.msra.mxu0 0.0
          %1550 = vmatprep.subr.mxu0 0.0
          %1551 = vmatpush1.msra.mxu0 0.0
          %1552 = vmatprep.subr.mxu0 0.0
          %1553 = vmatpush1.msra.mxu0 0.0
          %1554 = vmatprep.subr.mxu0 0.0
          %1555 = vmatpush1.msra.mxu0 0.0
          %1556 = vmatprep.mubr.f32.mxu0 0.0
          %1557 = vmatmul.mubr.f32.gmra.mrb[0].mxu0 %v1490
          %v1558 = vpop.f32.mrb[0].mxu0
          %v1559 = vadd.f32 %v1485, %v1558
          %v1560 = vpop.f32.mrb[0].mxu0
          %1561 = vdwg.mxu0
          %v1562 = vmax.f32 %v1559, 0.0
          %v1563 = vld [vmem:[%s11] sm:$0xff]
          %v1564 = vld [vmem:[%s11 + $0x8] sm:$0xff]
          %v1565 = vld [vmem:[%s11 + $0x10] sm:$0xff]
          %v1566 = vld [vmem:[%s11 + $0x18] sm:$0xff]
          %v1567 = vld [vmem:[%s11 + $0x20] sm:$0xff]
          %v1568 = vld [vmem:[%s11 + $0x28] sm:$0xff]
          %v1569 = vld [vmem:[%s11 + $0x30] sm:$0xff]
          %v1570 = vld [vmem:[%s11 + $0x38] sm:$0xff]
          %v1571 = vld [vmem:[%s12] sm:$0x1]
          %v1573 = vlaneseq
          %v1574 = vshrl.u32 %v1573, 7
          %v1575 = vsub.s32 0, %v1574
          %v1576 = vrot.slane %v1571, %v1575
          %vm1578 = vcmask 523264
          %v1580 = vsel %vm1578, %v1562, 0
          %1582 = vmatprep.subr.mxu0 0.0
          %1583 = vmatpush1.msra.mxu0 %v1563
          %1584 = vmatprep.subr.mxu0 0.0
          %1585 = vmatpush1.msra.mxu0 %v1564
          %1586 = vmatprep.subr.mxu0 0.0
          %1587 = vmatpush1.msra.mxu0 %v1565
          %1588 = vmatprep.subr.mxu0 0.0
          %1589 = vmatpush1.msra.mxu0 %v1566
          %1590 = vmatprep.subr.mxu0 0.0
          %1591 = vmatpush1.msra.mxu0 %v1567
          %1592 = vmatprep.subr.mxu0 0.0
          %1593 = vmatpush1.msra.mxu0 %v1568
          %1594 = vmatprep.subr.mxu0 0.0
          %1595 = vmatpush1.msra.mxu0 %v1569
          %1596 = vmatprep.subr.mxu0 0.0
          %1597 = vmatpush1.msra.mxu0 %v1570
          %1598 = vmatprep.subr.mxu0 0.0
          %1599 = vmatpush1.msra.mxu0 0.0
          %1600 = vmatprep.subr.mxu0 0.0
          %1601 = vmatpush1.msra.mxu0 0.0
          %1602 = vmatprep.subr.mxu0 0.0
          %1603 = vmatpush1.msra.mxu0 0.0
          %1604 = vmatprep.subr.mxu0 0.0
          %1605 = vmatpush1.msra.mxu0 0.0
          %1606 = vmatprep.subr.mxu0 0.0
          %1607 = vmatpush1.msra.mxu0 0.0
          %1608 = vmatprep.subr.mxu0 0.0
          %1609 = vmatpush1.msra.mxu0 0.0
          %1610 = vmatprep.subr.mxu0 0.0
          %1611 = vmatpush1.msra.mxu0 0.0
          %1612 = vmatprep.subr.mxu0 0.0
          %1613 = vmatpush1.msra.mxu0 0.0
          %1614 = vmatprep.subr.mxu0 0.0
          %1615 = vmatpush1.msra.mxu0 0.0
          %1616 = vmatprep.subr.mxu0 0.0
          %1617 = vmatpush1.msra.mxu0 0.0
          %1618 = vmatprep.subr.mxu0 0.0
          %1619 = vmatpush1.msra.mxu0 0.0
          %1620 = vmatprep.subr.mxu0 0.0
          %1621 = vmatpush1.msra.mxu0 0.0
          %1622 = vmatprep.subr.mxu0 0.0
          %1623 = vmatpush1.msra.mxu0 0.0
          %1624 = vmatprep.subr.mxu0 0.0
          %1625 = vmatpush1.msra.mxu0 0.0
          %1626 = vmatprep.subr.mxu0 0.0
          %1627 = vmatpush1.msra.mxu0 0.0
          %1628 = vmatprep.subr.mxu0 0.0
          %1629 = vmatpush1.msra.mxu0 0.0
          %1630 = vmatprep.subr.mxu0 0.0
          %1631 = vmatpush1.msra.mxu0 0.0
          %1632 = vmatprep.subr.mxu0 0.0
          %1633 = vmatpush1.msra.mxu0 0.0
          %1634 = vmatprep.subr.mxu0 0.0
          %1635 = vmatpush1.msra.mxu0 0.0
          %1636 = vmatprep.subr.mxu0 0.0
          %1637 = vmatpush1.msra.mxu0 0.0
          %1638 = vmatprep.subr.mxu0 0.0
          %1639 = vmatpush1.msra.mxu0 0.0
          %1640 = vmatprep.subr.mxu0 0.0
          %1641 = vmatpush1.msra.mxu0 0.0
          %1642 = vmatprep.subr.mxu0 0.0
          %1643 = vmatpush1.msra.mxu0 0.0
          %1644 = vmatprep.subr.mxu0 0.0
          %1645 = vmatpush1.msra.mxu0 0.0
          %1646 = vmatprep.mubr.f32.mxu0 0.0
          %1647 = vmatmul.mubr.f32.gmra.mrb[0].mxu0 %v1580
          %v1648 = vpop.f32.mrb[0].mxu0
          %v1649 = vadd.f32 %v1576, %v1648
          %v1650 = vpop.f32.mrb[0].mxu0
          %1651 = vdwg.mxu0
          %1653 = vrot.lane.b32.xlu0 %v1649, 64
          %v1654 = vpop.permute.xlu0 %1653
          %v1656 = vadd.f32 %v1475, %v1654
          %1658 = vrot.lane.b32.xlu0 %v1656, 64
          %v1659 = vpop.permute.xlu0 %1658
          %v1661 = vsel %vm726, %v1659, 0.0
          %1662 = vadd.xlane.f32.xlu0 %v1661
          %v1663 = vpop.xlane.xlu0 %1662
          %v1664 = vmul.f32 %v1663, %v1443
          %v1665 = vsub.f32 %v1656, %v1664
          %v1666 = vmul.f32 %v1665, %v1665
          %1668 = vrot.lane.b32.xlu0 %v1666, 64
          %v1669 = vpop.permute.xlu0 %1668
          %v1671 = vsel %vm726, %v1669, 0.0
          %1672 = vadd.xlane.f32.xlu0 %v1671
          %v1673 = vpop.xlane.xlu0 %1672
          %v1674 = vmul.f32 %v1673, %v1443
          %v1675 = vadd.f32 %v1674, 1e-05
          %v1676 = vrsqrt.pop %v1675
          %v1677 = vmul.f32 %v1665, %v1676
          %v1678 = vmul.f32 %v1677, %v1464
          %v1679 = vadd.f32 %v1678, %v1473
          %1681 = vrot.lane.b32.xlu0 %v1679, 64
          %v1682 = vpop.permute.xlu0 %1681
          %1684 = vst.msk [vmem:[%s551] sm:$0xff] %vm726, %v1682
        $region80: #{tpu_custom_call.1} parent=71 // pred_fallthru
          _
        %s1685 = sand.u32 %s361, 1
        %s1686 = scalar_lea.sflag [#allocation7], %s1685
        %s1687 = sand.u32 %s361, 1
        %s1688 = smul.addr %s1687, 8
        %s1689 = scalar_lea.vmem [#allocation6], %s1688
        // Predicated region
        $region81: #{tpu_custom_call.1} parent=71 // pred_check
          %p1690 = pneg %p371
        $region82: #{tpu_custom_call.1} parent=71 // pred_check_branch
          %1692 = sbr.rel (%p1690) target = $region84
        $region83: #{tpu_custom_call.1} parent=71 // pred_region
          %s1694 = ssub.s32 128, 128
          %1695 = vsyncadd %s1686, %s1694
          %s1696 = sadd.s32 %s33, %s32
          %s1697 = smul.addr %s1696, 128
          %s1698 = scalar_lea.hbm %s13, %s1697
          %s1700 = sshll.u32 %s1689, 4
          %s1701 = int_to_ptr.vmem [resolvable:$true] %s1700
          %1703 = dma.vmem_to_hbm [thread:$0]  %s1701, 128, %s1698, %s1686
        $region84: #{tpu_custom_call.1} parent=71 // pred_fallthru
          _
      $region72: #{tpu_custom_call.1} parent=5 // pred_fallthru
        _
      %p1704 = scmp.le.s32.totalorder 2, %s22
      // Predicated region
      $region85: #{tpu_custom_call.1} parent=5 // pred_check
        %p1705 = pneg %p1704
      $region86: #{tpu_custom_call.1} parent=5 // pred_check_branch
        %1707 = sbr.rel (%p1705) target = $region88
      $region87: #{tpu_custom_call.1} parent=5 // pred_region
        %s1708 = ssub.s32 %s22, 2
        // Predicated region
        $region89: #{tpu_custom_call.1} parent=87 // pred_check
          %p1709 = pneg %p377
        $region90: #{tpu_custom_call.1} parent=87 // pred_check_branch
          %1711 = sbr.rel (%p1709) target = $region92
        $region91: #{tpu_custom_call.1} parent=87 // pred_region
          %s1712 = sand.u32 %s362, 1
          %s1713 = scalar_lea.sflag [#allocation7], %s1712
          %s1714 = sand.u32 %s362, 1
          %s1715 = smul.addr %s1714, 8
          %s1716 = scalar_lea.vmem [#allocation6], %s1715
          %1717 = dma.done %s1713, 128
        $region92: #{tpu_custom_call.1} parent=87 // pred_fallthru
          _
      $region88: #{tpu_custom_call.1} parent=5 // pred_fallthru
        _
    $region6: #{tpu_custom_call.1} parent=1 // loop_footer
      %s26 = sadd.s32 1, %s22
    $region7: #{tpu_custom_call.1} parent=1 // loop_footer_branch
      %21 = sbr.rel target = $region3
    $region8: #{tpu_custom_call.1} parent=1 // loop_exit
      _
    %1718 = vsyncpa [#allocation7], 1
    %s1719 = scalar_lea.sflag [#allocation7], 1
    %1720 = vsyncpa %s1719, 1

</llo_original>
